<compile_context>
chip_gen: v6e
topology: v6e:2x2x1
jax: 0.10.0
libtpu: 0.0.40
codegen_flags: <defaults>
</compile_context>

<pallas_src>
import functools

import numpy as np
import jax
import jax.numpy as jnp
from jax.experimental import pallas as pl
from jax.experimental.pallas import tpu as pltpu


def _ceil_to(x, m):
    return ((x + m - 1) // m) * m


# ------------------------------ fused MultiMPN kernel ------------------------------
def _multi_mpn_kernel(x_ref, ea_ref, gcr_ref, scat_ref, ahat_ref,
                      w1_ref, sq_ref, w22_ref, b_ref, o_ref, *,
                      din_p, de_p, dh, K):
    """One grid step = one graph instance (batch element)."""
    x_bf = x_ref[0].astype(jnp.bfloat16)     # (N_pad, din_p)
    ea_bf = ea_ref[0]                        # (E_pad, de_p) bf16
    gcr = gcr_ref[...]                       # (E_pad, 2*N_pad) bf16 one-hot [g_col | g_row]
    scat = scat_ref[...]                     # (N_pad, E_pad)   bf16 one-hot scatter-add
    a_bf = ahat_ref[...]                     # (N_pad, N_pad)   bf16 D^-1/2 A D^-1/2

    # Static, tile-aligned views into the consolidated weight slabs (zero-cost).
    w1 = w1_ref[...]
    sq = sq_ref[...]
    b = b_ref[...]
    o2 = 2 * din_p + de_p
    w1i0, w1j0, w1e0 = w1[:din_p], w1[din_p:2 * din_p], w1[2 * din_p:o2]
    w1i2, w1j2 = w1[o2:o2 + dh], w1[o2 + dh:o2 + 2 * dh]
    w1e2 = w1[o2 + 2 * dh:o2 + 2 * dh + de_p]
    w2_0 = sq[:dh]
    tw = sq[dh:dh + (K + 1) * dh]            # stacked TAGConv weights ((K+1)*dh, dh)
    b1_0, b2_0, tb = b[0:1, :dh], b[1:2, :dh], b[2:3, :dh]
    b1_2, b2_2 = b[3:4, :dh], b[4:5, :]

    def edge_agg(xin_bf, wi, wj, we, b1, w2_bf, b2):
        # out[n] = sum_{e: col[e]==n} MLP([x[col[e]], x[row[e]], edge_attr[e]])
        # (PyG aggr='add'; `norm` is computed in the original forward but never
        #  consumed by message(), so it is correctly omitted.)
        # Weight-first reassociation:
        #   cat([x_i,x_j]) @ W_ij  ==  [g_col|g_row] @ stack([x@W_i, x@W_j], axis=0)
        ui = jnp.dot(xin_bf, wi, preferred_element_type=jnp.float32)       # (N_pad, dh)
        uj = jnp.dot(xin_bf, wj, preferred_element_type=jnp.float32)       # (N_pad, dh)
        u_bf = jnp.concatenate([ui, uj], axis=0).astype(jnp.bfloat16)      # (2*N_pad, dh)
        h = (jnp.dot(gcr, u_bf, preferred_element_type=jnp.float32)
             + jnp.dot(ea_bf, we, preferred_element_type=jnp.float32) + b1)
        h = jnp.maximum(h, 0.0)                                            # edge-MLP ReLU
        m = jnp.dot(h.astype(jnp.bfloat16), w2_bf,
                    preferred_element_type=jnp.float32) + b2               # (E_pad, d)
        # Scatter-add messages onto target nodes (padded edge columns are zero).
        return jnp.dot(scat, m.astype(jnp.bfloat16),
                       preferred_element_type=jnp.float32)

    # --- layer 0: EdgeAggregation(dim_featn, dim_feate, dim_hid, dim_hid) ---
    h0 = edge_agg(x_bf, w1i0, w1j0, w1e0, b1_0, w2_0, b2_0)
    # TODO(synk): dropout applied as identity (inference mode); PyTorch RNG not reproducible.
    h0 = jnp.maximum(h0, 0.0)                # fused post-layer ReLU

    # --- layer 1: TAGConv(dim_hid, dim_hid, K), fused into one MXU matmul ---
    xs = [h0.astype(jnp.bfloat16)]
    for _ in range(K):
        xs.append(jnp.dot(a_bf, xs[-1],
                          preferred_element_type=jnp.float32).astype(jnp.bfloat16))
    hcat = jnp.concatenate(xs, axis=1)       # (N_pad, (K+1)*dh) lane-axis stack
    h1 = jnp.dot(hcat, tw, preferred_element_type=jnp.float32) + tb
    h1 = jnp.maximum(h1, 0.0)                # fused post-layer ReLU (h0/h1 stay on-chip)

    # --- layer 2: EdgeAggregation(dim_hid, dim_feate, dim_hid, dim_out_pad), no ReLU ---
    o_ref[0] = edge_agg(h1.astype(jnp.bfloat16), w1i2, w1j2, w1e2, b1_2,
                        w22_ref[...], b2_2)


def multi_mpn_forward(x, edge_attr, gcr, scat, ahat, w1_slab, sq_slab, w22, bias_slab,
                      *, din_p, de_p, dh, K, dout_pad):
    b_sz, n_pad, _ = x.shape
    e_pad = edge_attr.shape[1]
    kernel = functools.partial(_multi_mpn_kernel, din_p=din_p, de_p=de_p, dh=dh, K=K)

    inputs = (x, edge_attr, gcr, scat, ahat, w1_slab, sq_slab, w22, bias_slab)
    footprint = sum(int(a.size) * a.dtype.itemsize for a in inputs)
    footprint += b_sz * n_pad * dout_pad * 4
    # Size the scoped VMEM limit from the actual operand footprint; keep it below
    # v7x's 64 MiB physical VMEM and at/above the v6e default (safe on v5e too).
    vmem_limit = int(min(max(8 * footprint, 32 * 1024 * 1024), 48 * 1024 * 1024))

    grid_spec = pltpu.PrefetchScalarGridSpec(
        num_scalar_prefetch=0,
        grid=(b_sz,),
        in_specs=[
            pl.BlockSpec((1, n_pad, din_p), lambda b: (b, 0, 0)),   # x (per-graph)
            pl.BlockSpec((1, e_pad, de_p), lambda b: (b, 0, 0)),    # edge_attr (per-graph)
            pl.BlockSpec(gcr.shape, lambda b: (0, 0)),              # grid-invariant
            pl.BlockSpec(scat.shape, lambda b: (0, 0)),
            pl.BlockSpec(ahat.shape, lambda b: (0, 0)),
            pl.BlockSpec(w1_slab.shape, lambda b: (0, 0)),
            pl.BlockSpec(sq_slab.shape, lambda b: (0, 0)),
            pl.BlockSpec(w22.shape, lambda b: (0, 0)),
            pl.BlockSpec(bias_slab.shape, lambda b: (0, 0)),
        ],
        out_specs=pl.BlockSpec((1, n_pad, dout_pad), lambda b: (b, 0, 0)),
    )
    return pl.pallas_call(
        kernel,
        out_shape=jax.ShapeDtypeStruct((b_sz, n_pad, dout_pad), jnp.float32),
        grid_spec=grid_spec,
        compiler_params=pltpu.CompilerParams(
            dimension_semantics=("parallel",),
            vmem_limit_bytes=vmem_limit),
    )(*inputs)


# --------------------------------- host-side glue ---------------------------------
def is_directed(edge_index):
    # Same logic as MultiMPN.is_directed (reads only the first edge).
    mask = edge_index[0, :] == edge_index[1, 0]
    return not np.isin(edge_index[0, 0], edge_index[1, mask])


def undirect_graph(edge_index, edge_attr):
    # edge_attr: (B, E, de), batched per graph instance (shared topology).
    if is_directed(edge_index):
        ei_dup = np.stack([edge_index[1, :], edge_index[0, :]], axis=0)
        edge_index = np.concatenate([edge_index, ei_dup], axis=1)
        edge_attr = np.concatenate([edge_attr, edge_attr], axis=1)
    return edge_index, edge_attr


def build_dense_graph_ops(edge_index, n_nodes, n_pad, e_pad):
    row, col = edge_index[0], edge_index[1]
    n_edges = row.shape[0]
    g_row = np.zeros((e_pad, n_pad), np.float32)
    g_row[np.arange(n_edges), row] = 1.0
    g_col = np.zeros((e_pad, n_pad), np.float32)
    g_col[np.arange(n_edges), col] = 1.0
    gcr = np.concatenate([g_col, g_row], axis=1)          # (E_pad, 2*N_pad) x_i|x_j gather
    scat = np.ascontiguousarray(g_col.T)                  # (N_pad, E_pad) scatter-add matrix
    # gcn_norm without self loops (TAGConv default normalize=True, add_self_loops=False)
    deg = np.zeros(n_nodes, np.float32)
    np.add.at(deg, col, 1.0)
    dis = np.zeros_like(deg)
    dis[deg > 0] = deg[deg > 0] ** -0.5
    norm = dis[row] * dis[col]
    a_hat = np.zeros((n_pad, n_pad), np.float32)
    np.add.at(a_hat, (col, row), norm)
    return gcr, scat, a_hat


def init_linear(key, fan_in, fan_out):
    kw, kb = jax.random.split(key)
    bound = 1.0 / np.sqrt(fan_in)
    w = jax.random.uniform(kw, (fan_in, fan_out), jnp.float32, -bound, bound)
    b = jax.random.uniform(kb, (1, fan_out), jnp.float32, -bound, bound)
    return w, b


def _pad_rows(a, rows):
    out = np.zeros((rows, a.shape[1]), np.float32)
    out[: a.shape[0]] = a
    return out


def _pad_cols(a, cols):
    out = np.zeros((a.shape[0], cols), np.float32)
    out[:, : a.shape[1]] = a
    return out


def build_weight_slabs(ea0_w1, ea0_b1, ea0_w2, ea0_b2, tag_w, tag_b,
                       ea2_w1, ea2_b1, ea2_w2, ea2_b2,
                       din, dh, din_p, de_p, dout_pad, k_hops):
    """Consolidate 19 tiny operands into 4 slabs (all sub-blocks 16-row aligned)."""
    w1i0, w1j0, w1e0 = ea0_w1[:din], ea0_w1[din:2 * din], ea0_w1[2 * din:]
    w1i2, w1j2, w1e2 = ea2_w1[:dh], ea2_w1[dh:2 * dh], ea2_w1[2 * dh:]
    w1_slab = np.concatenate([
        _pad_rows(w1i0, din_p), _pad_rows(w1j0, din_p), _pad_rows(w1e0, de_p),
        _pad_rows(w1i2, dh), _pad_rows(w1j2, dh), _pad_rows(w1e2, de_p)], axis=0)
    sq_slab = np.concatenate(
        [ea0_w2, tag_w.reshape((k_hops + 1) * dh, dh)], axis=0)   # (dh + (K+1)*dh, dh)
    w22 = _pad_cols(ea2_w2, dout_pad)                             # lane-dense final weight
    bias_slab = np.zeros((8, dout_pad), np.float32)
    bias_slab[0, :dh] = ea0_b1[0]
    bias_slab[1, :dh] = ea0_b2[0]
    bias_slab[2, :dh] = tag_b[0]
    bias_slab[3, :dh] = ea2_b1[0]
    bias_slab[4, :ea2_b2.shape[1]] = ea2_b2[0]
    return (jnp.asarray(w1_slab, jnp.bfloat16), jnp.asarray(sq_slab, jnp.bfloat16),
            jnp.asarray(w22, jnp.bfloat16), jnp.asarray(bias_slab, jnp.float32))


# ------------------------------ references (pure JAX) ------------------------------
def edge_agg_matched_ref(x, ea_bf, row, col, w1i_bf, w1j_bf, w1e_bf, b1, w2_bf, b2, n_nodes):
    """Index-gather/scatter formulation mirroring the kernel's bf16 rounding points."""
    x_bf = x.astype(jnp.bfloat16)
    ui = jnp.dot(x_bf, w1i_bf, preferred_element_type=jnp.float32).astype(jnp.bfloat16)
    uj = jnp.dot(x_bf, w1j_bf, preferred_element_type=jnp.float32).astype(jnp.bfloat16)
    h = (ui[col].astype(jnp.float32) + uj[row].astype(jnp.float32)
         + jnp.dot(ea_bf, w1e_bf, preferred_element_type=jnp.float32) + b1)
    h = jax.nn.relu(h)
    m = jnp.dot(h.astype(jnp.bfloat16), w2_bf, preferred_element_type=jnp.float32) + b2
    m_q = m.astype(jnp.bfloat16).astype(jnp.float32)
    return jnp.zeros((n_nodes, w2_bf.shape[1]), jnp.float32).at[col].add(m_q)


def tagconv_matched_ref(h, a_bf, tw_stacked_bf, tb, k_hops):
    xs = [h.astype(jnp.bfloat16)]
    for _ in range(k_hops):
        xs.append(jnp.dot(a_bf, xs[-1],
                          preferred_element_type=jnp.float32).astype(jnp.bfloat16))
    hcat = jnp.concatenate(xs, axis=1)
    return jnp.dot(hcat, tw_stacked_bf, preferred_element_type=jnp.float32) + tb


def edge_agg_f32_ref(x, ea, row, col, w1, b1, w2, b2):
    cat = jnp.concatenate([x[col], x[row], ea], axis=-1)
    h = jax.nn.relu(cat @ w1 + b1)
    m = h @ w2 + b2
    return jnp.zeros((x.shape[0], w2.shape[1]), jnp.float32).at[col].add(m)


def tagconv_f32_ref(x, a_hat, w_stack, bias):
    out = x @ w_stack[0]
    h = x
    for k in range(1, w_stack.shape[0]):
        h = a_hat @ h
        out = out + h @ w_stack[k]
    return out + bias


if __name__ == "__main__":
    # Small config (batch of graph instances sharing one topology)
    BATCH = 4
    N_NODES = 16
    DIM_FEATN, DIM_FEATE = 4, 3
    DIM_HID, DIM_OUT = 32, 8
    K = 3
    DROPOUT_RATE = 0.5   # identity at inference (see TODO in kernel)

    DIN_P = _ceil_to(DIM_FEATN, 16)     # pad node-feature dim to bf16 tile boundary
    DE_P = _ceil_to(DIM_FEATE, 16)      # pad edge-feature dim likewise
    DOUT_PAD = 128                      # lane-dense output, sliced back on host

    key = jax.random.PRNGKey(0)
    keys = jax.random.split(key, 12)

    # Directed graph: a ring plus random chords.
    rng = np.random.RandomState(0)
    src = np.arange(N_NODES)
    dst = (src + 1) % N_NODES
    chords_src = rng.randint(0, N_NODES, size=8)
    chords_dst = rng.randint(0, N_NODES, size=8)
    edge_index = np.stack(
        [np.concatenate([src, chords_src]), np.concatenate([dst, chords_dst])],
        axis=0).astype(np.int32)
    n_edges_dir = edge_index.shape[1]

    x = jax.random.normal(keys[0], (BATCH, N_NODES, DIM_FEATN), jnp.float32)
    edge_attr_dir = np.asarray(
        jax.random.normal(keys[1], (BATCH, n_edges_dir, DIM_FEATE), jnp.float32))

    # undirect_graph (host glue — pure index manipulation)
    edge_index_u, edge_attr_u = undirect_graph(edge_index, edge_attr_dir)
    n_edges = edge_index_u.shape[1]
    row_np, col_np = edge_index_u[0], edge_index_u[1]

    N_PAD = _ceil_to(N_NODES, 16)
    E_PAD = _ceil_to(n_edges, 16)
    gcr_np, scat_np, ahat_np = build_dense_graph_ops(edge_index_u, N_NODES, N_PAD, E_PAD)
    gcr_bf = jnp.asarray(gcr_np, jnp.bfloat16)     # exact 0/1 in bf16
    scat_bf = jnp.asarray(scat_np, jnp.bfloat16)   # exact 0/1 in bf16
    ahat_bf = jnp.asarray(ahat_np, jnp.bfloat16)   # ~1e-3 relative rounding

    # Padded, batched node / edge features.
    x_pad_np = np.zeros((BATCH, N_PAD, DIN_P), np.float32)
    x_pad_np[:, :N_NODES, :DIM_FEATN] = np.asarray(x)
    ea_pad_np = np.zeros((BATCH, E_PAD, DE_P), np.float32)
    ea_pad_np[:, :n_edges, :DIM_FEATE] = edge_attr_u
    x_pad = jnp.asarray(x_pad_np)
    ea_pad_bf = jnp.asarray(ea_pad_np, jnp.bfloat16)

    # Parameters (deterministic)
    ea0_w1, ea0_b1 = init_linear(keys[2], 2 * DIM_FEATN + DIM_FEATE, DIM_HID)
    ea0_w2, ea0_b2 = init_linear(keys[3], DIM_HID, DIM_HID)
    tag_ws = [init_linear(keys[4 + k], DIM_HID, DIM_HID)[0] for k in range(K + 1)]
    tag_w = jnp.stack(tag_ws)                                   # (K+1, DIM_HID, DIM_HID)
    tag_b = init_linear(keys[8], DIM_HID, DIM_HID)[1]           # (1, DIM_HID)
    ea2_w1, ea2_b1 = init_linear(keys[9], 2 * DIM_HID + DIM_FEATE, DIM_HID)
    ea2_w2, ea2_b2 = init_linear(keys[10], DIM_HID, DIM_OUT)

    w1_slab, sq_slab, w22_slab, bias_slab = build_weight_slabs(
        np.asarray(ea0_w1), np.asarray(ea0_b1), np.asarray(ea0_w2), np.asarray(ea0_b2),
        np.asarray(tag_w), np.asarray(tag_b),
        np.asarray(ea2_w1), np.asarray(ea2_b1), np.asarray(ea2_w2), np.asarray(ea2_b2),
        DIM_FEATN, DIM_HID, DIN_P, DE_P, DOUT_PAD, K)

    # ---- forward pass: single fused Pallas kernel, grid over the graph batch ----
    out_pad = multi_mpn_forward(x_pad, ea_pad_bf, gcr_bf, scat_bf, ahat_bf,
                                w1_slab, sq_slab, w22_slab, bias_slab,
                                din_p=DIN_P, de_p=DE_P, dh=DIM_HID, K=K,
                                dout_pad=DOUT_PAD)
    out_pad = jax.block_until_ready(out_pad)
    out = np.asarray(out_pad)[:, :N_NODES, :DIM_OUT]   # strip node / lane padding

    # bf16 weights used by the matched reference (same rounding as the kernel slabs)
    w1i0_bf = ea0_w1[:DIM_FEATN].astype(jnp.bfloat16)
    w1j0_bf = ea0_w1[DIM_FEATN:2 * DIM_FEATN].astype(jnp.bfloat16)
    w1e0_bf = ea0_w1[2 * DIM_FEATN:].astype(jnp.bfloat16)
    w20_bf = ea0_w2.astype(jnp.bfloat16)
    tw_stacked_bf = tag_w.reshape((K + 1) * DIM_HID, DIM_HID).astype(jnp.bfloat16)
    w1i2_bf = ea2_w1[:DIM_HID].astype(jnp.bfloat16)
    w1j2_bf = ea2_w1[DIM_HID:2 * DIM_HID].astype(jnp.bfloat16)
    w1e2_bf = ea2_w1[2 * DIM_HID:].astype(jnp.bfloat16)
    w22_bf = ea2_w2.astype(jnp.bfloat16)
    ahat_real_f32 = jnp.asarray(ahat_np[:N_NODES, :N_NODES])
    ahat_real_bf = ahat_real_f32.astype(jnp.bfloat16)

    for bi in range(BATCH):
        xb = x[bi]
        eab = jnp.asarray(edge_attr_u[bi])
        eab_bf = eab.astype(jnp.bfloat16)

        # ---- check 1: pure-JAX reference mirroring the kernel's bf16 rounding points ----
        r0 = jax.nn.relu(edge_agg_matched_ref(xb, eab_bf, row_np, col_np,
                                              w1i0_bf, w1j0_bf, w1e0_bf, ea0_b1,
                                              w20_bf, ea0_b2, N_NODES))
        r1 = jax.nn.relu(tagconv_matched_ref(r0, ahat_real_bf, tw_stacked_bf, tag_b, K))
        r2 = edge_agg_matched_ref(r1, eab_bf, row_np, col_np,
                                  w1i2_bf, w1j2_bf, w1e2_bf, ea2_b1,
                                  w22_bf, ea2_b2, N_NODES)
        np.testing.assert_allclose(out[bi], np.asarray(r2), rtol=2e-2, atol=2e-2)

        # ---- check 2: full-f32 semantics of the original module (bounds bf16 deviation) ----
        f0 = jax.nn.relu(edge_agg_f32_ref(xb, eab, row_np, col_np,
                                          ea0_w1, ea0_b1, ea0_w2, ea0_b2))
        f1 = jax.nn.relu(tagconv_f32_ref(f0, ahat_real_f32, tag_w, tag_b))
        f2 = edge_agg_f32_ref(f1, eab, row_np, col_np, ea2_w1, ea2_b1, ea2_w2, ea2_b2)
        np.testing.assert_allclose(out[bi], np.asarray(f2), rtol=1e-1, atol=1e-1)

    print("KERNEL_OK")
</pallas_src>

<mosaic_0001>
module attributes {stable_mosaic.version = 11 : i64} {
  func.func @_multi_mpn_kernel(%arg0: i32, %arg1: memref<1x16x16xf32, #tpu.memory_space<vmem>>, %arg2: memref<1x48x16xbf16, #tpu.memory_space<vmem>>, %arg3: memref<48x32xbf16, #tpu.memory_space<vmem>>, %arg4: memref<16x48xbf16, #tpu.memory_space<vmem>>, %arg5: memref<16x16xbf16, #tpu.memory_space<vmem>>, %arg6: memref<128x32xbf16, #tpu.memory_space<vmem>>, %arg7: memref<160x32xbf16, #tpu.memory_space<vmem>>, %arg8: memref<32x128xbf16, #tpu.memory_space<vmem>>, %arg9: memref<8x128xf32, #tpu.memory_space<vmem>>, %arg10: memref<1x16x128xf32, #tpu.memory_space<vmem>>) attributes {dimension_semantics = [#tpu.dimension_semantics<parallel>], iteration_bounds = array<i64: 4>, scalar_prefetch = 0 : i64, scratch_operands = 0 : i64, tpu.core_type = #tpu.core_type<tc>, window_params = [{transform_indices = @transform_0, window_bounds = array<i64: 1, 16, 16>}, {transform_indices = @transform_1, window_bounds = array<i64: 1, 48, 16>}, {pipeline_mode = #tpu.pipeline_mode<synchronous>, transform_indices = @transform_2, window_bounds = array<i64: 48, 32>}, {pipeline_mode = #tpu.pipeline_mode<synchronous>, transform_indices = @transform_3, window_bounds = array<i64: 16, 48>}, {pipeline_mode = #tpu.pipeline_mode<synchronous>, transform_indices = @transform_4, window_bounds = array<i64: 16, 16>}, {pipeline_mode = #tpu.pipeline_mode<synchronous>, transform_indices = @transform_5, window_bounds = array<i64: 128, 32>}, {pipeline_mode = #tpu.pipeline_mode<synchronous>, transform_indices = @transform_6, window_bounds = array<i64: 160, 32>}, {pipeline_mode = #tpu.pipeline_mode<synchronous>, transform_indices = @transform_7, window_bounds = array<i64: 32, 128>}, {pipeline_mode = #tpu.pipeline_mode<synchronous>, transform_indices = @transform_8, window_bounds = array<i64: 8, 128>}, {transform_indices = @transform_9, window_bounds = array<i64: 1, 16, 128>}]} {
    %c0 = arith.constant 0 : index
    %c0_0 = arith.constant 0 : index
    %c0_1 = arith.constant 0 : index
    %0 = vector.load %arg1[%c0, %c0_0, %c0_1] : memref<1x16x16xf32, #tpu.memory_space<vmem>>, vector<1x16x16xf32>
    %1 = vector.shape_cast %0 : vector<1x16x16xf32> to vector<16x16xf32>
    %2 = arith.truncf %1 : vector<16x16xf32> to vector<16x16xbf16>
    %c0_2 = arith.constant 0 : index
    %c0_3 = arith.constant 0 : index
    %c0_4 = arith.constant 0 : index
    %3 = vector.load %arg2[%c0_2, %c0_3, %c0_4] : memref<1x48x16xbf16, #tpu.memory_space<vmem>>, vector<1x48x16xbf16>
    %4 = vector.shape_cast %3 : vector<1x48x16xbf16> to vector<48x16xbf16>
    %c0_5 = arith.constant 0 : index
    %c0_6 = arith.constant 0 : index
    %5 = vector.load %arg3[%c0_5, %c0_6] : memref<48x32xbf16, #tpu.memory_space<vmem>>, vector<48x32xbf16>
    %c0_7 = arith.constant 0 : index
    %c0_8 = arith.constant 0 : index
    %6 = vector.load %arg4[%c0_7, %c0_8] : memref<16x48xbf16, #tpu.memory_space<vmem>>, vector<16x48xbf16>
    %c0_9 = arith.constant 0 : index
    %c0_10 = arith.constant 0 : index
    %7 = vector.load %arg5[%c0_9, %c0_10] : memref<16x16xbf16, #tpu.memory_space<vmem>>, vector<16x16xbf16>
    %c0_11 = arith.constant 0 : index
    %c0_12 = arith.constant 0 : index
    %8 = vector.load %arg6[%c0_11, %c0_12] : memref<128x32xbf16, #tpu.memory_space<vmem>>, vector<128x32xbf16>
    %c0_13 = arith.constant 0 : index
    %c0_14 = arith.constant 0 : index
    %9 = vector.load %arg7[%c0_13, %c0_14] : memref<160x32xbf16, #tpu.memory_space<vmem>>, vector<160x32xbf16>
    %c0_15 = arith.constant 0 : index
    %c0_16 = arith.constant 0 : index
    %10 = vector.load %arg9[%c0_15, %c0_16] : memref<8x128xf32, #tpu.memory_space<vmem>>, vector<8x128xf32>
    %11 = vector.extract_strided_slice %8 {offsets = [0, 0], sizes = [16, 32], strides = [1, 1]} : vector<128x32xbf16> to vector<16x32xbf16>
    %12 = vector.extract_strided_slice %8 {offsets = [16, 0], sizes = [16, 32], strides = [1, 1]} : vector<128x32xbf16> to vector<16x32xbf16>
    %13 = vector.extract_strided_slice %8 {offsets = [32, 0], sizes = [16, 32], strides = [1, 1]} : vector<128x32xbf16> to vector<16x32xbf16>
    %14 = vector.extract_strided_slice %8 {offsets = [48, 0], sizes = [32, 32], strides = [1, 1]} : vector<128x32xbf16> to vector<32x32xbf16>
    %15 = vector.extract_strided_slice %8 {offsets = [80, 0], sizes = [32, 32], strides = [1, 1]} : vector<128x32xbf16> to vector<32x32xbf16>
    %16 = vector.extract_strided_slice %8 {offsets = [112, 0], sizes = [16, 32], strides = [1, 1]} : vector<128x32xbf16> to vector<16x32xbf16>
    %17 = vector.extract_strided_slice %9 {offsets = [0, 0], sizes = [32, 32], strides = [1, 1]} : vector<160x32xbf16> to vector<32x32xbf16>
    %18 = vector.extract_strided_slice %9 {offsets = [32, 0], sizes = [128, 32], strides = [1, 1]} : vector<160x32xbf16> to vector<128x32xbf16>
    %19 = vector.extract_strided_slice %10 {offsets = [0, 0], sizes = [1, 32], strides = [1, 1]} : vector<8x128xf32> to vector<1x32xf32>
    %20 = vector.extract_strided_slice %10 {offsets = [1, 0], sizes = [1, 32], strides = [1, 1]} : vector<8x128xf32> to vector<1x32xf32>
    %21 = vector.extract_strided_slice %10 {offsets = [2, 0], sizes = [1, 32], strides = [1, 1]} : vector<8x128xf32> to vector<1x32xf32>
    %22 = vector.extract_strided_slice %10 {offsets = [3, 0], sizes = [1, 32], strides = [1, 1]} : vector<8x128xf32> to vector<1x32xf32>
    %23 = vector.extract_strided_slice %10 {offsets = [4, 0], sizes = [1, 128], strides = [1, 1]} : vector<8x128xf32> to vector<1x128xf32>
    %cst = arith.constant dense<0.000000e+00> : vector<16x32xf32>
    %24 = tpu.matmul %2, %11, %cst {dimension_numbers = #tpu.dot_dimension_numbers<[1], [0], [0], [1], [0, 0, 1, 1], [], []>} : vector<16x16xbf16>, vector<16x32xbf16>, vector<16x32xf32> -> vector<16x32xf32>
    %cst_17 = arith.constant dense<0.000000e+00> : vector<16x32xf32>
    %25 = tpu.matmul %2, %12, %cst_17 {dimension_numbers = #tpu.dot_dimension_numbers<[1], [0], [0], [1], [0, 0, 1, 1], [], []>} : vector<16x16xbf16>, vector<16x32xbf16>, vector<16x32xf32> -> vector<16x32xf32>
    %26 = tpu.concatenate %24, %25 in 0 : vector<16x32xf32>, vector<16x32xf32> -> vector<32x32xf32>
    %27 = arith.truncf %26 : vector<32x32xf32> to vector<32x32xbf16>
    %cst_18 = arith.constant dense<0.000000e+00> : vector<48x32xf32>
    %28 = tpu.matmul %5, %27, %cst_18 {dimension_numbers = #tpu.dot_dimension_numbers<[1], [0], [0], [1], [0, 0, 1, 1], [], []>} : vector<48x32xbf16>, vector<32x32xbf16>, vector<48x32xf32> -> vector<48x32xf32>
    %cst_19 = arith.constant dense<0.000000e+00> : vector<48x32xf32>
    %29 = tpu.matmul %4, %13, %cst_19 {dimension_numbers = #tpu.dot_dimension_numbers<[1], [0], [0], [1], [0, 0, 1, 1], [], []>} : vector<48x16xbf16>, vector<16x32xbf16>, vector<48x32xf32> -> vector<48x32xf32>
    %30 = arith.addf %28, %29 : vector<48x32xf32>
    %31 = vector.broadcast %19 : vector<1x32xf32> to vector<48x32xf32>
    %32 = arith.addf %30, %31 : vector<48x32xf32>
    %cst_20 = arith.constant 0.000000e+00 : f32
    %33 = vector.broadcast %cst_20 : f32 to vector<48x32xf32>
    %34 = arith.maximumf %32, %33 : vector<48x32xf32>
    %35 = arith.truncf %34 : vector<48x32xf32> to vector<48x32xbf16>
    %cst_21 = arith.constant dense<0.000000e+00> : vector<48x32xf32>
    %36 = tpu.matmul %35, %17, %cst_21 {dimension_numbers = #tpu.dot_dimension_numbers<[1], [0], [0], [1], [0, 0, 1, 1], [], []>} : vector<48x32xbf16>, vector<32x32xbf16>, vector<48x32xf32> -> vector<48x32xf32>
    %37 = vector.broadcast %20 : vector<1x32xf32> to vector<48x32xf32>
    %38 = arith.addf %36, %37 : vector<48x32xf32>
    %39 = arith.truncf %38 : vector<48x32xf32> to vector<48x32xbf16>
    %cst_22 = arith.constant dense<0.000000e+00> : vector<16x32xf32>
    %40 = tpu.matmul %6, %39, %cst_22 {dimension_numbers = #tpu.dot_dimension_numbers<[1], [0], [0], [1], [0, 0, 1, 1], [], []>} : vector<16x48xbf16>, vector<48x32xbf16>, vector<16x32xf32> -> vector<16x32xf32>
    %cst_23 = arith.constant 0.000000e+00 : f32
    %41 = vector.broadcast %cst_23 : f32 to vector<16x32xf32>
    %42 = arith.maximumf %40, %41 : vector<16x32xf32>
    %43 = arith.truncf %42 : vector<16x32xf32> to vector<16x32xbf16>
    %cst_24 = arith.constant dense<0.000000e+00> : vector<16x32xf32>
    %44 = tpu.matmul %7, %43, %cst_24 {dimension_numbers = #tpu.dot_dimension_numbers<[1], [0], [0], [1], [0, 0, 1, 1], [], []>} : vector<16x16xbf16>, vector<16x32xbf16>, vector<16x32xf32> -> vector<16x32xf32>
    %45 = arith.truncf %44 : vector<16x32xf32> to vector<16x32xbf16>
    %cst_25 = arith.constant dense<0.000000e+00> : vector<16x32xf32>
    %46 = tpu.matmul %7, %45, %cst_25 {dimension_numbers = #tpu.dot_dimension_numbers<[1], [0], [0], [1], [0, 0, 1, 1], [], []>} : vector<16x16xbf16>, vector<16x32xbf16>, vector<16x32xf32> -> vector<16x32xf32>
    %47 = arith.truncf %46 : vector<16x32xf32> to vector<16x32xbf16>
    %cst_26 = arith.constant dense<0.000000e+00> : vector<16x32xf32>
    %48 = tpu.matmul %7, %47, %cst_26 {dimension_numbers = #tpu.dot_dimension_numbers<[1], [0], [0], [1], [0, 0, 1, 1], [], []>} : vector<16x16xbf16>, vector<16x32xbf16>, vector<16x32xf32> -> vector<16x32xf32>
    %49 = arith.truncf %48 : vector<16x32xf32> to vector<16x32xbf16>
    %50 = tpu.concatenate %43, %45, %47, %49 in 1 : vector<16x32xbf16>, vector<16x32xbf16>, vector<16x32xbf16>, vector<16x32xbf16> -> vector<16x128xbf16>
    %cst_27 = arith.constant dense<0.000000e+00> : vector<16x32xf32>
    %51 = tpu.matmul %50, %18, %cst_27 {dimension_numbers = #tpu.dot_dimension_numbers<[1], [0], [0], [1], [0, 0, 1, 1], [], []>} : vector<16x128xbf16>, vector<128x32xbf16>, vector<16x32xf32> -> vector<16x32xf32>
    %52 = vector.broadcast %21 : vector<1x32xf32> to vector<16x32xf32>
    %53 = arith.addf %51, %52 : vector<16x32xf32>
    %cst_28 = arith.constant 0.000000e+00 : f32
    %54 = vector.broadcast %cst_28 : f32 to vector<16x32xf32>
    %55 = arith.maximumf %53, %54 : vector<16x32xf32>
    %56 = arith.truncf %55 : vector<16x32xf32> to vector<16x32xbf16>
    %c0_29 = arith.constant 0 : index
    %c0_30 = arith.constant 0 : index
    %57 = vector.load %arg8[%c0_29, %c0_30] : memref<32x128xbf16, #tpu.memory_space<vmem>>, vector<32x128xbf16>
    %cst_31 = arith.constant dense<0.000000e+00> : vector<16x32xf32>
    %58 = tpu.matmul %56, %14, %cst_31 {dimension_numbers = #tpu.dot_dimension_numbers<[1], [0], [0], [1], [0, 0, 1, 1], [], []>} : vector<16x32xbf16>, vector<32x32xbf16>, vector<16x32xf32> -> vector<16x32xf32>
    %cst_32 = arith.constant dense<0.000000e+00> : vector<16x32xf32>
    %59 = tpu.matmul %56, %15, %cst_32 {dimension_numbers = #tpu.dot_dimension_numbers<[1], [0], [0], [1], [0, 0, 1, 1], [], []>} : vector<16x32xbf16>, vector<32x32xbf16>, vector<16x32xf32> -> vector<16x32xf32>
    %60 = tpu.concatenate %58, %59 in 0 : vector<16x32xf32>, vector<16x32xf32> -> vector<32x32xf32>
    %61 = arith.truncf %60 : vector<32x32xf32> to vector<32x32xbf16>
    %cst_33 = arith.constant dense<0.000000e+00> : vector<48x32xf32>
    %62 = tpu.matmul %5, %61, %cst_33 {dimension_numbers = #tpu.dot_dimension_numbers<[1], [0], [0], [1], [0, 0, 1, 1], [], []>} : vector<48x32xbf16>, vector<32x32xbf16>, vector<48x32xf32> -> vector<48x32xf32>
    %cst_34 = arith.constant dense<0.000000e+00> : vector<48x32xf32>
    %63 = tpu.matmul %4, %16, %cst_34 {dimension_numbers = #tpu.dot_dimension_numbers<[1], [0], [0], [1], [0, 0, 1, 1], [], []>} : vector<48x16xbf16>, vector<16x32xbf16>, vector<48x32xf32> -> vector<48x32xf32>
    %64 = arith.addf %62, %63 : vector<48x32xf32>
    %65 = vector.broadcast %22 : vector<1x32xf32> to vector<48x32xf32>
    %66 = arith.addf %64, %65 : vector<48x32xf32>
    %cst_35 = arith.constant 0.000000e+00 : f32
    %67 = vector.broadcast %cst_35 : f32 to vector<48x32xf32>
    %68 = arith.maximumf %66, %67 : vector<48x32xf32>
    %69 = arith.truncf %68 : vector<48x32xf32> to vector<48x32xbf16>
    %cst_36 = arith.constant dense<0.000000e+00> : vector<48x128xf32>
    %70 = tpu.matmul %69, %57, %cst_36 {dimension_numbers = #tpu.dot_dimension_numbers<[1], [0], [0], [1], [0, 0, 1, 1], [], []>} : vector<48x32xbf16>, vector<32x128xbf16>, vector<48x128xf32> -> vector<48x128xf32>
    %71 = vector.broadcast %23 : vector<1x128xf32> to vector<48x128xf32>
    %72 = arith.addf %70, %71 : vector<48x128xf32>
    %73 = arith.truncf %72 : vector<48x128xf32> to vector<48x128xbf16>
    %cst_37 = arith.constant dense<0.000000e+00> : vector<16x128xf32>
    %74 = tpu.matmul %6, %73, %cst_37 {dimension_numbers = #tpu.dot_dimension_numbers<[1], [0], [0], [1], [0, 0, 1, 1], [], []>} : vector<16x48xbf16>, vector<48x128xbf16>, vector<16x128xf32> -> vector<16x128xf32>
    %c0_38 = arith.constant 0 : index
    %c0_39 = arith.constant 0 : index
    %c0_40 = arith.constant 0 : index
    %75 = vector.load %arg10[%c0_38, %c0_39, %c0_40] : memref<1x16x128xf32, #tpu.memory_space<vmem>>, vector<1x16x128xf32>
    %76 = vector.shape_cast %75 : vector<1x16x128xf32> to vector<16x128xf32>
    %77 = vector.shape_cast %74 : vector<16x128xf32> to vector<1x16x128xf32>
    tpu.vector_store %arg10[%c0_38, %c0_39, %c0_40], %77 {strides = array<i32>} : memref<1x16x128xf32, #tpu.memory_space<vmem>>, vector<1x16x128xf32>,
    return
  }
  func.func @transform_0(%arg0: i32) -> (i32, i32, i32) {
    %c0_i32 = arith.constant 0 : i32
    %c0_i32_0 = arith.constant 0 : i32
    %c0_i32_1 = arith.constant 0 : i32
    return %arg0, %c0_i32, %c0_i32_0 : i32, i32, i32
  }
  func.func @transform_1(%arg0: i32) -> (i32, i32, i32) {
    %c0_i32 = arith.constant 0 : i32
    %c0_i32_0 = arith.constant 0 : i32
    %c0_i32_1 = arith.constant 0 : i32
    return %arg0, %c0_i32, %c0_i32_0 : i32, i32, i32
  }
  func.func @transform_2(%arg0: i32) -> (i32, i32) {
    %c0_i32 = arith.constant 0 : i32
    %c0_i32_0 = arith.constant 0 : i32
    %c0_i32_1 = arith.constant 0 : i32
    return %c0_i32, %c0_i32_0 : i32, i32
  }
  func.func @transform_3(%arg0: i32) -> (i32, i32) {
    %c0_i32 = arith.constant 0 : i32
    %c0_i32_0 = arith.constant 0 : i32
    %c0_i32_1 = arith.constant 0 : i32
    return %c0_i32, %c0_i32_0 : i32, i32
  }
  func.func @transform_4(%arg0: i32) -> (i32, i32) {
    %c0_i32 = arith.constant 0 : i32
    %c0_i32_0 = arith.constant 0 : i32
    %c0_i32_1 = arith.constant 0 : i32
    return %c0_i32, %c0_i32_0 : i32, i32
  }
  func.func @transform_5(%arg0: i32) -> (i32, i32) {
    %c0_i32 = arith.constant 0 : i32
    %c0_i32_0 = arith.constant 0 : i32
    %c0_i32_1 = arith.constant 0 : i32
    return %c0_i32, %c0_i32_0 : i32, i32
  }
  func.func @transform_6(%arg0: i32) -> (i32, i32) {
    %c0_i32 = arith.constant 0 : i32
    %c0_i32_0 = arith.constant 0 : i32
    %c0_i32_1 = arith.constant 0 : i32
    return %c0_i32, %c0_i32_0 : i32, i32
  }
  func.func @transform_7(%arg0: i32) -> (i32, i32) {
    %c0_i32 = arith.constant 0 : i32
    %c0_i32_0 = arith.constant 0 : i32
    %c0_i32_1 = arith.constant 0 : i32
    return %c0_i32, %c0_i32_0 : i32, i32
  }
  func.func @transform_8(%arg0: i32) -> (i32, i32) {
    %c0_i32 = arith.constant 0 : i32
    %c0_i32_0 = arith.constant 0 : i32
    %c0_i32_1 = arith.constant 0 : i32
    return %c0_i32, %c0_i32_0 : i32, i32
  }
  func.func @transform_9(%arg0: i32) -> (i32, i32, i32) {
    %c0_i32 = arith.constant 0 : i32
    %c0_i32_0 = arith.constant 0 : i32
    %c0_i32_1 = arith.constant 0 : i32
    return %arg0, %c0_i32, %c0_i32_0 : i32, i32, i32
  }
}

</mosaic_0001>

<llo_original>
// kernel: tpu_custom_call.1
$region0: #{tpu_custom_call.1}
  #allocation0 [shape = 'u32[]', space=smem, size = 0x4, offset = 0x4, fixed_abs, tag = 'smem constant byte address 0x4 - core index']
  #allocation1 [shape = 'u32[144,128]{1,0:T(1,128)}', space=vmem, size = 0x12000, scoped, tag = 'internal scratch']
  %s0 = inlined_call_operand.vmem [shape: f32[4,16,16], index: 0, kind: input, shape index: {}]
  %s1 = inlined_call_operand.vmem [shape: bf16[4,48,16], index: 1, kind: input, shape index: {}]
  %s2 = inlined_call_operand.vmem [shape: bf16[48,32], index: 2, kind: input, shape index: {}]
  %s3 = inlined_call_operand.vmem [shape: bf16[16,48], index: 3, kind: input, shape index: {}]
  %s4 = inlined_call_operand.vmem [shape: bf16[16,16], index: 4, kind: input, shape index: {}]
  %s5 = inlined_call_operand.vmem [shape: bf16[128,32], index: 5, kind: input, shape index: {}]
  %s6 = inlined_call_operand.vmem [shape: bf16[160,32], index: 6, kind: input, shape index: {}]
  %s7 = inlined_call_operand.vmem [shape: bf16[32,128], index: 7, kind: input, shape index: {}]
  %s8 = inlined_call_operand.vmem [shape: f32[8,128], index: 8, kind: input, shape index: {}]
  %s9 = inlined_call_operand.hbm [shape: f32[4,16,128], index: 9, kind: output, shape index: {}]
  %s10 = sld [smem:[#allocation0]]
  $region69: #{tpu_custom_call.1} parent=0
    _
  %s12 = ssub.s32 1, %s10
  %s13 = scalar_select 0, %s12, %s10
  $region1: #{tpu_custom_call.1} parent=0
    #allocation2 [shape = 'u8[16384]{0}', space=vmem, size = 0x4000, scoped, tag = 'output window, operand 0']
    #allocation3 [shape = 's32[2]{0}', space=sflag, size = 0x8, scoped, tag = 'scoped memory for tpu_custom_call.1']
    %14 = vsyncpa [#allocation3], 0
    %s15 = scalar_lea.sflag [#allocation3], 1
    %16 = vsyncpa %s15, 0
    loop: start=0, step=1, limit=6
    $region2: #{tpu_custom_call.1} parent=1 // loop_pre_header
      _
    $region3: #{tpu_custom_call.1} parent=1 // loop_header
      %s18 = sphi 0, %s22
      %p19 = scmp.ge.s32.totalorder %s18, 6
      %s28 = sphi 0, %s30
      %s31 = sphi 0, %s28
      %s32 = sphi 0, %s31
      %s48 = sphi 0, %s32
      %s54 = sphi 0, %s56
      %s57 = sphi 0, %s54
      %s58 = sphi 0, %s57
      %s74 = sphi 0, %s58
      %s78 = sphi 0, %s78
      %s80 = sphi 0, %s78
      %s81 = sphi 0, %s80
      %s95 = sphi 0, %s81
      %s99 = sphi 0, %s99
      %s101 = sphi 0, %s99
      %s102 = sphi 0, %s101
      %s116 = sphi 0, %s102
      %s120 = sphi 0, %s120
      %s122 = sphi 0, %s120
      %s123 = sphi 0, %s122
      %s137 = sphi 0, %s123
      %s141 = sphi 0, %s141
      %s143 = sphi 0, %s141
      %s144 = sphi 0, %s143
      %s158 = sphi 0, %s144
      %s162 = sphi 0, %s162
      %s164 = sphi 0, %s162
      %s165 = sphi 0, %s164
      %s179 = sphi 0, %s165
      %s183 = sphi 0, %s183
      %s185 = sphi 0, %s183
      %s186 = sphi 0, %s185
      %s200 = sphi 0, %s186
      %s204 = sphi 0, %s204
      %s206 = sphi 0, %s204
      %s207 = sphi 0, %s206
      %s221 = sphi 0, %s207
      %s227 = sphi 0, %s229
      %s230 = sphi 0, %s227
      %s231 = sphi 0, %s230
      %s247 = sphi 0, %s231
    $region4: #{tpu_custom_call.1} parent=1 // loop_header_branch
      %21 = sbr.rel (%p19) target = $region8
    $region5: #{tpu_custom_call.1} parent=1 // loop_body
      %s23 = ssub.s32 %s18, 1
      %s24 = ssub.s32 %s18, 2
      %s25 = sadd.s32 %s18, 1
      %s26 = ssub.s32 %s18, %s25
      %p27 = scmp.eq.s32.totalorder %s26, 0
      %s29 = sadd.s32 %s28, 1
      %s30 = scalar_select %p27, %s28, %s29
      %p33 = pneg %p27
      %p34 = scmp.eq.s32.totalorder %s18, 3
      %p35 = por %p33, %p34
      %p36 = scmp.ne.s32.totalorder %s28, %s31
      %p37 = scmp.eq.s32.totalorder %s18, 0
      %p38 = por %p36, %p37
      %p39 = scmp.ne.s32.totalorder %s28, %s31
      %p40 = scmp.eq.s32.totalorder %s23, 3
      %p41 = por %p39, %p40
      %p42 = scmp.ne.s32.totalorder %s31, %s32
      %p43 = scmp.eq.s32.totalorder %s23, 0
      %p44 = por %p42, %p43
      %p45 = scmp.ne.s32.totalorder %s31, %s32
      %p46 = scmp.eq.s32.totalorder %s24, 3
      %p47 = por %p45, %p46
      %p49 = scmp.ne.s32.totalorder %s32, %s48
      %p50 = scmp.eq.s32.totalorder %s24, 0
      %p51 = por %p49, %p50
      %s52 = ssub.s32 %s18, %s25
      %p53 = scmp.eq.s32.totalorder %s52, 0
      %s55 = sadd.s32 %s54, 1
      %s56 = scalar_select %p53, %s54, %s55
      %p59 = pneg %p53
      %p60 = scmp.eq.s32.totalorder %s18, 3
      %p61 = por %p59, %p60
      %p62 = scmp.ne.s32.totalorder %s54, %s57
      %p63 = scmp.eq.s32.totalorder %s18, 0
      %p64 = por %p62, %p63
      %p65 = scmp.ne.s32.totalorder %s54, %s57
      %p66 = scmp.eq.s32.totalorder %s23, 3
      %p67 = por %p65, %p66
      %p68 = scmp.ne.s32.totalorder %s57, %s58
      %p69 = scmp.eq.s32.totalorder %s23, 0
      %p70 = por %p68, %p69
      %p71 = scmp.ne.s32.totalorder %s57, %s58
      %p72 = scmp.eq.s32.totalorder %s24, 3
      %p73 = por %p71, %p72
      %p75 = scmp.ne.s32.totalorder %s58, %s74
      %p76 = scmp.eq.s32.totalorder %s24, 0
      %p77 = por %p75, %p76
      %s79 = sadd.s32 %s78, 1
      %p82 = scmp.eq.s32.totalorder %s18, 3
      %p83 = scmp.ne.s32.totalorder %s78, %s80
      %p84 = scmp.eq.s32.totalorder %s18, 0
      %p85 = por %p83, %p84
      %p86 = scmp.ne.s32.totalorder %s78, %s80
      %p87 = scmp.eq.s32.totalorder %s23, 3
      %p88 = por %p86, %p87
      %p89 = scmp.ne.s32.totalorder %s80, %s81
      %p90 = scmp.eq.s32.totalorder %s23, 0
      %p91 = por %p89, %p90
      %p92 = scmp.ne.s32.totalorder %s80, %s81
      %p93 = scmp.eq.s32.totalorder %s24, 3
      %p94 = por %p92, %p93
      %p96 = scmp.ne.s32.totalorder %s81, %s95
      %p97 = scmp.eq.s32.totalorder %s24, 0
      %p98 = por %p96, %p97
      %s100 = sadd.s32 %s99, 1
      %p103 = scmp.eq.s32.totalorder %s18, 3
      %p104 = scmp.ne.s32.totalorder %s99, %s101
      %p105 = scmp.eq.s32.totalorder %s18, 0
      %p106 = por %p104, %p105
      %p107 = scmp.ne.s32.totalorder %s99, %s101
      %p108 = scmp.eq.s32.totalorder %s23, 3
      %p109 = por %p107, %p108
      %p110 = scmp.ne.s32.totalorder %s101, %s102
      %p111 = scmp.eq.s32.totalorder %s23, 0
      %p112 = por %p110, %p111
      %p113 = scmp.ne.s32.totalorder %s101, %s102
      %p114 = scmp.eq.s32.totalorder %s24, 3
      %p115 = por %p113, %p114
      %p117 = scmp.ne.s32.totalorder %s102, %s116
      %p118 = scmp.eq.s32.totalorder %s24, 0
      %p119 = por %p117, %p118
      %s121 = sadd.s32 %s120, 1
      %p124 = scmp.eq.s32.totalorder %s18, 3
      %p125 = scmp.ne.s32.totalorder %s120, %s122
      %p126 = scmp.eq.s32.totalorder %s18, 0
      %p127 = por %p125, %p126
      %p128 = scmp.ne.s32.totalorder %s120, %s122
      %p129 = scmp.eq.s32.totalorder %s23, 3
      %p130 = por %p128, %p129
      %p131 = scmp.ne.s32.totalorder %s122, %s123
      %p132 = scmp.eq.s32.totalorder %s23, 0
      %p133 = por %p131, %p132
      %p134 = scmp.ne.s32.totalorder %s122, %s123
      %p135 = scmp.eq.s32.totalorder %s24, 3
      %p136 = por %p134, %p135
      %p138 = scmp.ne.s32.totalorder %s123, %s137
      %p139 = scmp.eq.s32.totalorder %s24, 0
      %p140 = por %p138, %p139
      %s142 = sadd.s32 %s141, 1
      %p145 = scmp.eq.s32.totalorder %s18, 3
      %p146 = scmp.ne.s32.totalorder %s141, %s143
      %p147 = scmp.eq.s32.totalorder %s18, 0
      %p148 = por %p146, %p147
      %p149 = scmp.ne.s32.totalorder %s141, %s143
      %p150 = scmp.eq.s32.totalorder %s23, 3
      %p151 = por %p149, %p150
      %p152 = scmp.ne.s32.totalorder %s143, %s144
      %p153 = scmp.eq.s32.totalorder %s23, 0
      %p154 = por %p152, %p153
      %p155 = scmp.ne.s32.totalorder %s143, %s144
      %p156 = scmp.eq.s32.totalorder %s24, 3
      %p157 = por %p155, %p156
      %p159 = scmp.ne.s32.totalorder %s144, %s158
      %p160 = scmp.eq.s32.totalorder %s24, 0
      %p161 = por %p159, %p160
      %s163 = sadd.s32 %s162, 1
      %p166 = scmp.eq.s32.totalorder %s18, 3
      %p167 = scmp.ne.s32.totalorder %s162, %s164
      %p168 = scmp.eq.s32.totalorder %s18, 0
      %p169 = por %p167, %p168
      %p170 = scmp.ne.s32.totalorder %s162, %s164
      %p171 = scmp.eq.s32.totalorder %s23, 3
      %p172 = por %p170, %p171
      %p173 = scmp.ne.s32.totalorder %s164, %s165
      %p174 = scmp.eq.s32.totalorder %s23, 0
      %p175 = por %p173, %p174
      %p176 = scmp.ne.s32.totalorder %s164, %s165
      %p177 = scmp.eq.s32.totalorder %s24, 3
      %p178 = por %p176, %p177
      %p180 = scmp.ne.s32.totalorder %s165, %s179
      %p181 = scmp.eq.s32.totalorder %s24, 0
      %p182 = por %p180, %p181
      %s184 = sadd.s32 %s183, 1
      %p187 = scmp.eq.s32.totalorder %s18, 3
      %p188 = scmp.ne.s32.totalorder %s183, %s185
      %p189 = scmp.eq.s32.totalorder %s18, 0
      %p190 = por %p188, %p189
      %p191 = scmp.ne.s32.totalorder %s183, %s185
      %p192 = scmp.eq.s32.totalorder %s23, 3
      %p193 = por %p191, %p192
      %p194 = scmp.ne.s32.totalorder %s185, %s186
      %p195 = scmp.eq.s32.totalorder %s23, 0
      %p196 = por %p194, %p195
      %p197 = scmp.ne.s32.totalorder %s185, %s186
      %p198 = scmp.eq.s32.totalorder %s24, 3
      %p199 = por %p197, %p198
      %p201 = scmp.ne.s32.totalorder %s186, %s200
      %p202 = scmp.eq.s32.totalorder %s24, 0
      %p203 = por %p201, %p202
      %s205 = sadd.s32 %s204, 1
      %p208 = scmp.eq.s32.totalorder %s18, 3
      %p209 = scmp.ne.s32.totalorder %s204, %s206
      %p210 = scmp.eq.s32.totalorder %s18, 0
      %p211 = por %p209, %p210
      %p212 = scmp.ne.s32.totalorder %s204, %s206
      %p213 = scmp.eq.s32.totalorder %s23, 3
      %p214 = por %p212, %p213
      %p215 = scmp.ne.s32.totalorder %s206, %s207
      %p216 = scmp.eq.s32.totalorder %s23, 0
      %p217 = por %p215, %p216
      %p218 = scmp.ne.s32.totalorder %s206, %s207
      %p219 = scmp.eq.s32.totalorder %s24, 3
      %p220 = por %p218, %p219
      %p222 = scmp.ne.s32.totalorder %s207, %s221
      %p223 = scmp.eq.s32.totalorder %s24, 0
      %p224 = por %p222, %p223
      %s225 = ssub.s32 %s18, %s25
      %p226 = scmp.eq.s32.totalorder %s225, 0
      %s228 = sadd.s32 %s227, 1
      %s229 = scalar_select %p226, %s227, %s228
      %p232 = pneg %p226
      %p233 = scmp.eq.s32.totalorder %s18, 3
      %p234 = por %p232, %p233
      %p235 = scmp.ne.s32.totalorder %s227, %s230
      %p236 = scmp.eq.s32.totalorder %s18, 0
      %p237 = por %p235, %p236
      %p238 = scmp.ne.s32.totalorder %s227, %s230
      %p239 = scmp.eq.s32.totalorder %s23, 3
      %p240 = por %p238, %p239
      %p241 = scmp.ne.s32.totalorder %s230, %s231
      %p242 = scmp.eq.s32.totalorder %s23, 0
      %p243 = por %p241, %p242
      %p244 = scmp.ne.s32.totalorder %s230, %s231
      %p245 = scmp.eq.s32.totalorder %s24, 3
      %p246 = por %p244, %p245
      %p248 = scmp.ne.s32.totalorder %s231, %s247
      %p249 = scmp.eq.s32.totalorder %s24, 0
      %p250 = por %p248, %p249
      %p251 = scmp.le.s32.totalorder 1, %s18
      %p252 = scmp.lt.s32.totalorder %s18, 5
      %p253 = pnand %p251, %p252
      %p254 = pneg %p253
      // Predicated region
      $region9: #{tpu_custom_call.1} parent=5 // pred_check
        _
      $region10: #{tpu_custom_call.1} parent=5 // pred_check_branch
        %256 = sbr.rel (%p253) target = $region12
      $region11: #{tpu_custom_call.1} parent=5 // pred_region
        %s257 = ssub.s32 %s18, 1
        // Predicated region
        $region13: #{tpu_custom_call.1} parent=11 // pred_check
          %p258 = pneg %p91
        $region14: #{tpu_custom_call.1} parent=11 // pred_check_branch
          %260 = sbr.rel (%p258) target = $region16
        $region15: #{tpu_custom_call.1} parent=11 // pred_region
          _
        $region16: #{tpu_custom_call.1} parent=11 // pred_fallthru
          _
        // Predicated region
        $region17: #{tpu_custom_call.1} parent=11 // pred_check
          %p261 = pneg %p112
        $region18: #{tpu_custom_call.1} parent=11 // pred_check_branch
          %263 = sbr.rel (%p261) target = $region20
        $region19: #{tpu_custom_call.1} parent=11 // pred_region
          _
        $region20: #{tpu_custom_call.1} parent=11 // pred_fallthru
          _
        // Predicated region
        $region21: #{tpu_custom_call.1} parent=11 // pred_check
          %p264 = pneg %p133
        $region22: #{tpu_custom_call.1} parent=11 // pred_check_branch
          %266 = sbr.rel (%p264) target = $region24
        $region23: #{tpu_custom_call.1} parent=11 // pred_region
          _
        $region24: #{tpu_custom_call.1} parent=11 // pred_fallthru
          _
        // Predicated region
        $region25: #{tpu_custom_call.1} parent=11 // pred_check
          %p267 = pneg %p154
        $region26: #{tpu_custom_call.1} parent=11 // pred_check_branch
          %269 = sbr.rel (%p267) target = $region28
        $region27: #{tpu_custom_call.1} parent=11 // pred_region
          _
        $region28: #{tpu_custom_call.1} parent=11 // pred_fallthru
          _
        // Predicated region
        $region29: #{tpu_custom_call.1} parent=11 // pred_check
          %p270 = pneg %p175
        $region30: #{tpu_custom_call.1} parent=11 // pred_check_branch
          %272 = sbr.rel (%p270) target = $region32
        $region31: #{tpu_custom_call.1} parent=11 // pred_region
          _
        $region32: #{tpu_custom_call.1} parent=11 // pred_fallthru
          _
        // Predicated region
        $region33: #{tpu_custom_call.1} parent=11 // pred_check
          %p273 = pneg %p196
        $region34: #{tpu_custom_call.1} parent=11 // pred_check_branch
          %275 = sbr.rel (%p273) target = $region36
        $region35: #{tpu_custom_call.1} parent=11 // pred_region
          _
        $region36: #{tpu_custom_call.1} parent=11 // pred_fallthru
          _
        // Predicated region
        $region37: #{tpu_custom_call.1} parent=11 // pred_check
          %p276 = pneg %p217
        $region38: #{tpu_custom_call.1} parent=11 // pred_check_branch
          %278 = sbr.rel (%p276) target = $region40
        $region39: #{tpu_custom_call.1} parent=11 // pred_region
          _
        $region40: #{tpu_custom_call.1} parent=11 // pred_fallthru
          _
      $region12: #{tpu_custom_call.1} parent=5 // pred_fallthru
        _
      %p279 = scmp.lt.s32.totalorder %s18, 4
      // Predicated region
      $region41: #{tpu_custom_call.1} parent=5 // pred_check
        %p280 = pneg %p279
      $region42: #{tpu_custom_call.1} parent=5 // pred_check_branch
        %282 = sbr.rel (%p280) target = $region44
      $region43: #{tpu_custom_call.1} parent=5 // pred_region
        // Predicated region
        $region45: #{tpu_custom_call.1} parent=43 // pred_check
          %p283 = pneg %p38
        $region46: #{tpu_custom_call.1} parent=43 // pred_check_branch
          %285 = sbr.rel (%p283) target = $region48
        $region47: #{tpu_custom_call.1} parent=43 // pred_region
          %p286 = scmp.lt.s32.totalorder %s18, 3
          %s287 = scalar_select %p286, %s18, 3
          %s288 = smul.addr %s287, 2
          %s289 = smul.addr %s288, 8
          %s290 = scalar_lea.vmem %s0, %s289
        $region48: #{tpu_custom_call.1} parent=43 // pred_fallthru
          _
        // Predicated region
        $region49: #{tpu_custom_call.1} parent=43 // pred_check
          %p291 = pneg %p64
        $region50: #{tpu_custom_call.1} parent=43 // pred_check_branch
          %293 = sbr.rel (%p291) target = $region52
        $region51: #{tpu_custom_call.1} parent=43 // pred_region
          %p294 = scmp.lt.s32.totalorder %s18, 3
          %s295 = scalar_select %p294, %s18, 3
          %s296 = smul.addr %s295, 6
          %s297 = smul.addr %s296, 4
          %s298 = scalar_lea.vmem %s1, %s297
        $region52: #{tpu_custom_call.1} parent=43 // pred_fallthru
          _
      $region44: #{tpu_custom_call.1} parent=5 // pred_fallthru
        _
      %p299 = scmp.le.s32.totalorder 1, %s18
      %p300 = scmp.lt.s32.totalorder %s18, 5
      %p301 = pnand %p299, %p300
      %p302 = pneg %p301
      // Predicated region
      $region53: #{tpu_custom_call.1} parent=5 // pred_check
        _
      $region54: #{tpu_custom_call.1} parent=5 // pred_check_branch
        %304 = sbr.rel (%p301) target = $region56
      $region55: #{tpu_custom_call.1} parent=5 // pred_region
        %s305 = ssub.s32 %s18, 1
        %p306 = scmp.lt.s32.totalorder %s23, 3
        %s307 = scalar_select %p306, %s23, 3
        %s308 = smul.addr %s307, 2
        %s309 = smul.addr %s308, 8
        %s310 = scalar_lea.vmem %s0, %s309
        %p311 = pneg %p44
        %p312 = pneg %p41
        %p313 = scmp.lt.s32.totalorder %s23, 3
        %s314 = scalar_select %p313, %s23, 3
        %s315 = smul.addr %s314, 6
        %s316 = smul.addr %s315, 4
        %s317 = scalar_lea.vmem %s1, %s316
        %p318 = pneg %p70
        %p319 = pneg %p67
        %p320 = pneg %p91
        %p321 = pneg %p88
        %p322 = pneg %p112
        %p323 = pneg %p109
        %p324 = pneg %p133
        %p325 = pneg %p130
        %p326 = pneg %p154
        %p327 = pneg %p151
        %p328 = pneg %p175
        %p329 = pneg %p172
        %p330 = pneg %p196
        %p331 = pneg %p193
        %p332 = pneg %p217
        %p333 = pneg %p214
        %p334 = pneg %p243
        %p335 = pneg %p240
        %s336 = sand.u32 %s230, 1
        %s337 = scalar_lea.sflag [#allocation3], %s336
        %s338 = sand.u32 %s230, 1
        %s339 = smul.addr %s338, 16
        %s340 = scalar_lea.vmem [#allocation2], %s339
        %p341 = scmp.lt.s32.totalorder %s23, 3
        %s342 = scalar_select %p341, %s23, 3
        %s343 = smul.addr %s342, 2
        %s344 = smul.addr %s343, 8
        %s345 = scalar_lea.vmem %s0, %s344
        %p346 = scmp.lt.s32.totalorder %s23, 3
        %s347 = scalar_select %p346, %s23, 3
        %s348 = smul.addr %s347, 6
        %s349 = smul.addr %s348, 4
        %s350 = scalar_lea.vmem %s1, %s349
        %v352 = vld [vmem:[%s345] sm:$0xff]
        %v353 = vld [vmem:[%s345 + $0x8] sm:$0xff]
        %v354 = vpack.c.bf16 %v353, %v352
        %v355 = vld [vmem:[%s350] sm:$0xf]
        %v356 = vld [vmem:[%s350 + $0x4] sm:$0xf]
        %v357 = vld [vmem:[%s350 + $0x8] sm:$0xf]
        %v358 = vld [vmem:[%s350 + $0xc] sm:$0xf]
        %v359 = vld [vmem:[%s350 + $0x10] sm:$0xf]
        %v360 = vld [vmem:[%s350 + $0x14] sm:$0xf]
        %v361 = vld [vmem:[%s2] sm:$0xf]
        %v362 = vld [vmem:[%s2 + $0x4] sm:$0xf]
        %v363 = vld [vmem:[%s2 + $0x8] sm:$0xf]
        %v364 = vld [vmem:[%s2 + $0xc] sm:$0xf]
        %v365 = vld [vmem:[%s2 + $0x10] sm:$0xf]
        %v366 = vld [vmem:[%s2 + $0x14] sm:$0xf]
        %v367 = vld [vmem:[%s3] sm:$0xf]
        %v368 = vld [vmem:[%s3 + $0x4] sm:$0xf]
        %v369 = vld [vmem:[%s4] sm:$0xf]
        %v370 = vld [vmem:[%s4 + $0x4] sm:$0xf]
        %v371 = vld [vmem:[%s5] sm:$0xf]
        %v372 = vld [vmem:[%s5 + $0x4] sm:$0xf]
        %v373 = vld [vmem:[%s5 + $0x8] sm:$0xf]
        %v374 = vld [vmem:[%s5 + $0xc] sm:$0xf]
        %v375 = vld [vmem:[%s5 + $0x10] sm:$0xf]
        %v376 = vld [vmem:[%s5 + $0x14] sm:$0xf]
        %v377 = vld [vmem:[%s5 + $0x18] sm:$0xf]
        %v378 = vld [vmem:[%s5 + $0x1c] sm:$0xf]
        %v379 = vld [vmem:[%s5 + $0x20] sm:$0xf]
        %v380 = vld [vmem:[%s5 + $0x24] sm:$0xf]
        %v381 = vld [vmem:[%s5 + $0x28] sm:$0xf]
        %v382 = vld [vmem:[%s5 + $0x2c] sm:$0xf]
        %v383 = vld [vmem:[%s5 + $0x30] sm:$0xf]
        %v384 = vld [vmem:[%s5 + $0x34] sm:$0xf]
        %v385 = vld [vmem:[%s5 + $0x38] sm:$0xf]
        %v386 = vld [vmem:[%s5 + $0x3c] sm:$0xf]
        %v387 = vld [vmem:[%s6] sm:$0xf]
        %v388 = vld [vmem:[%s6 + $0x4] sm:$0xf]
        %v389 = vld [vmem:[%s6 + $0x8] sm:$0xf]
        %v390 = vld [vmem:[%s6 + $0xc] sm:$0xf]
        %v391 = vld [vmem:[%s6 + $0x10] sm:$0xf]
        %v392 = vld [vmem:[%s6 + $0x14] sm:$0xf]
        %v393 = vld [vmem:[%s6 + $0x18] sm:$0xf]
        %v394 = vld [vmem:[%s6 + $0x1c] sm:$0xf]
        %v395 = vld [vmem:[%s6 + $0x20] sm:$0xf]
        %v396 = vld [vmem:[%s6 + $0x24] sm:$0xf]
        %v397 = vld [vmem:[%s6 + $0x28] sm:$0xf]
        %v398 = vld [vmem:[%s6 + $0x2c] sm:$0xf]
        %v399 = vld [vmem:[%s6 + $0x30] sm:$0xf]
        %v400 = vld [vmem:[%s6 + $0x34] sm:$0xf]
        %v401 = vld [vmem:[%s6 + $0x38] sm:$0xf]
        %v402 = vld [vmem:[%s6 + $0x3c] sm:$0xf]
        %v403 = vld [vmem:[%s6 + $0x40] sm:$0xf]
        %v404 = vld [vmem:[%s6 + $0x44] sm:$0xf]
        %v405 = vld [vmem:[%s6 + $0x48] sm:$0xf]
        %v406 = vld [vmem:[%s6 + $0x4c] sm:$0xf]
        %v407 = vld [vmem:[%s8] sm:$0xff]
        %v410 = vunpack.c.l.b16 %v371
        %v411 = vunpack.c.l.b16 %v372
        %v412 = vpack.c.b16 %v411, %v410
        %vm414 = vcmask 130048
        %v416 = vsel %vm414, %v354, 0
        %418 = vmatprep.subr.bf16.mxu0 0
        %419 = vmatpush1.bf16.msra.mxu0 0
        %420 = vmatprep.subr.bf16.mxu0 0
        %421 = vmatpush1.bf16.msra.mxu0 0
        %422 = vmatprep.subr.bf16.mxu0 0
        %423 = vmatpush1.bf16.msra.mxu0 0
        %424 = vmatprep.subr.bf16.mxu0 0
        %425 = vmatpush1.bf16.msra.mxu0 0
        %426 = vmatprep.subr.bf16.mxu0 0
        %427 = vmatpush1.bf16.msra.mxu0 0
        %428 = vmatprep.subr.bf16.mxu0 0
        %429 = vmatpush1.bf16.msra.mxu0 0
        %430 = vmatprep.subr.bf16.mxu0 0
        %431 = vmatpush1.bf16.msra.mxu0 0
        %432 = vmatprep.subr.bf16.mxu0 0
        %433 = vmatpush1.bf16.msra.mxu0 %v412
        %434 = vmatprep.subr.bf16.mxu0 0
        %435 = vmatpush2.bf16.msra.mxu0 0
        %436 = vmatprep.subr.bf16.mxu0 0
        %437 = vmatpush2.bf16.msra.mxu0 0
        %438 = vmatprep.subr.bf16.mxu0 0
        %439 = vmatpush2.bf16.msra.mxu0 0
        %440 = vmatprep.subr.bf16.mxu0 0
        %441 = vmatpush2.bf16.msra.mxu0 0
        %442 = vmatprep.subr.bf16.mxu0 0
        %443 = vmatpush2.bf16.msra.mxu0 0
        %444 = vmatprep.subr.bf16.mxu0 0
        %445 = vmatpush2.bf16.msra.mxu0 0
        %446 = vmatprep.subr.bf16.mxu0 0
        %447 = vmatpush2.bf16.msra.mxu0 0
        %448 = vmatprep.subr.bf16.mxu0 0
        %449 = vmatpush2.bf16.msra.mxu0 0
        %450 = vmatprep.mubr.bf16.mxu0 0
        %451 = vmatmul.mubr.bf16.gmra.mxu0 %v416
        %v452 = vpop.f32.mrf.mxu0
        %v453 = vadd.f32 0.0, %v452
        %v454 = vpop.f32.mrf.mxu0
        %v455 = vpop.f32.mrf.mxu0
        %v456 = vadd.f32 0.0, %v455
        %v457 = vpop.f32.mrf.mxu0
        %458 = vdwg.mxu0
        %v461 = vunpack.c.l.b16 %v373
        %v462 = vunpack.c.l.b16 %v374
        %v463 = vpack.c.b16 %v462, %v461
        %465 = vmatprep.subr.bf16.mxu0 0
        %466 = vmatpush1.bf16.msra.mxu0 0
        %467 = vmatprep.subr.bf16.mxu0 0
        %468 = vmatpush1.bf16.msra.mxu0 0
        %469 = vmatprep.subr.bf16.mxu0 0
        %470 = vmatpush1.bf16.msra.mxu0 0
        %471 = vmatprep.subr.bf16.mxu0 0
        %472 = vmatpush1.bf16.msra.mxu0 0
        %473 = vmatprep.subr.bf16.mxu0 0
        %474 = vmatpush1.bf16.msra.mxu0 0
        %475 = vmatprep.subr.bf16.mxu0 0
        %476 = vmatpush1.bf16.msra.mxu0 0
        %477 = vmatprep.subr.bf16.mxu0 0
        %478 = vmatpush1.bf16.msra.mxu0 0
        %479 = vmatprep.subr.bf16.mxu0 0
        %480 = vmatpush1.bf16.msra.mxu0 %v463
        %481 = vmatprep.subr.bf16.mxu0 0
        %482 = vmatpush2.bf16.msra.mxu0 0
        %483 = vmatprep.subr.bf16.mxu0 0
        %484 = vmatpush2.bf16.msra.mxu0 0
        %485 = vmatprep.subr.bf16.mxu0 0
        %486 = vmatpush2.bf16.msra.mxu0 0
        %487 = vmatprep.subr.bf16.mxu0 0
        %488 = vmatpush2.bf16.msra.mxu0 0
        %489 = vmatprep.subr.bf16.mxu0 0
        %490 = vmatpush2.bf16.msra.mxu0 0
        %491 = vmatprep.subr.bf16.mxu0 0
        %492 = vmatpush2.bf16.msra.mxu0 0
        %493 = vmatprep.subr.bf16.mxu0 0
        %494 = vmatpush2.bf16.msra.mxu0 0
        %495 = vmatprep.subr.bf16.mxu0 0
        %496 = vmatpush2.bf16.msra.mxu0 0
        %497 = vmatprep.mubr.bf16.mxu0 0
        %498 = vmatmul.mubr.bf16.gmra.mxu0 %v416
        %v499 = vpop.f32.mrf.mxu0
        %v500 = vadd.f32 0.0, %v499
        %v501 = vpop.f32.mrf.mxu0
        %v502 = vpop.f32.mrf.mxu0
        %v503 = vadd.f32 0.0, %v502
        %v504 = vpop.f32.mrf.mxu0
        %505 = vdwg.mxu0
        %v506 = vpack.c.bf16 %v456, %v453
        %v507 = vpack.c.bf16 %v503, %v500
        %v514 = vunpack.c.l.b16 %v355
        %v515 = vunpack.c.l.b16 %v356
        %v516 = vunpack.c.l.b16 %v357
        %v517 = vunpack.c.l.b16 %v358
        %v518 = vunpack.c.l.b16 %v359
        %v519 = vunpack.c.l.b16 %v360
        %v520 = vpack.c.b16 %v515, %v514
        %v521 = vpack.c.b16 %v517, %v516
        %v522 = vpack.c.b16 %v519, %v518
        %v525 = vunpack.c.l.b16 %v375
        %v526 = vunpack.c.l.b16 %v376
        %v527 = vpack.c.b16 %v526, %v525
        %v530 = vsel %vm414, %v520, 0
        %v533 = vsel %vm414, %v521, 0
        %v536 = vsel %vm414, %v522, 0
        %538 = vmatprep.subr.bf16.mxu0 0
        %539 = vmatpush1.bf16.msra.mxu0 0
        %540 = vmatprep.subr.bf16.mxu0 0
        %541 = vmatpush1.bf16.msra.mxu0 0
        %542 = vmatprep.subr.bf16.mxu0 0
        %543 = vmatpush1.bf16.msra.mxu0 0
        %544 = vmatprep.subr.bf16.mxu0 0
        %545 = vmatpush1.bf16.msra.mxu0 0
        %546 = vmatprep.subr.bf16.mxu0 0
        %547 = vmatpush1.bf16.msra.mxu0 0
        %548 = vmatprep.subr.bf16.mxu0 0
        %549 = vmatpush1.bf16.msra.mxu0 0
        %550 = vmatprep.subr.bf16.mxu0 0
        %551 = vmatpush1.bf16.msra.mxu0 0
        %552 = vmatprep.subr.bf16.mxu0 0
        %553 = vmatpush1.bf16.msra.mxu0 %v527
        %554 = vmatprep.subr.bf16.mxu0 0
        %555 = vmatpush2.bf16.msra.mxu0 0
        %556 = vmatprep.subr.bf16.mxu0 0
        %557 = vmatpush2.bf16.msra.mxu0 0
        %558 = vmatprep.subr.bf16.mxu0 0
        %559 = vmatpush2.bf16.msra.mxu0 0
        %560 = vmatprep.subr.bf16.mxu0 0
        %561 = vmatpush2.bf16.msra.mxu0 0
        %562 = vmatprep.subr.bf16.mxu0 0
        %563 = vmatpush2.bf16.msra.mxu0 0
        %564 = vmatprep.subr.bf16.mxu0 0
        %565 = vmatpush2.bf16.msra.mxu0 0
        %566 = vmatprep.subr.bf16.mxu0 0
        %567 = vmatpush2.bf16.msra.mxu0 0
        %568 = vmatprep.subr.bf16.mxu0 0
        %569 = vmatpush2.bf16.msra.mxu0 0
        %570 = vmatprep.mubr.bf16.mxu0 0
        %571 = vmatmul.mubr.bf16.gmra.mxu0 %v530
        %v572 = vpop.f32.mrf.mxu0
        %v573 = vadd.f32 0.0, %v572
        %v574 = vpop.f32.mrf.mxu0
        %v575 = vpop.f32.mrf.mxu0
        %v576 = vadd.f32 0.0, %v575
        %v577 = vpop.f32.mrf.mxu0
        %578 = vmatprep.mubr.bf16.mxu0 0
        %579 = vmatmul.mubr.bf16.gmra.mxu0 %v533
        %v580 = vpop.f32.mrf.mxu0
        %v581 = vadd.f32 0.0, %v580
        %v582 = vpop.f32.mrf.mxu0
        %v583 = vpop.f32.mrf.mxu0
        %v584 = vadd.f32 0.0, %v583
        %v585 = vpop.f32.mrf.mxu0
        %586 = vmatprep.mubr.bf16.mxu0 0
        %587 = vmatmul.mubr.bf16.gmra.mxu0 %v536
        %v588 = vpop.f32.mrf.mxu0
        %v589 = vadd.f32 0.0, %v588
        %v590 = vpop.f32.mrf.mxu0
        %v591 = vpop.f32.mrf.mxu0
        %v592 = vadd.f32 0.0, %v591
        %v593 = vpop.f32.mrf.mxu0
        %594 = vdwg.mxu0
        %v601 = vunpack.c.l.b16 %v361
        %v602 = vunpack.c.l.b16 %v362
        %v603 = vunpack.c.l.b16 %v363
        %v604 = vunpack.c.l.b16 %v364
        %v605 = vunpack.c.l.b16 %v365
        %v606 = vunpack.c.l.b16 %v366
        %v607 = vpack.c.b16 %v602, %v601
        %v608 = vpack.c.b16 %v604, %v603
        %v609 = vpack.c.b16 %v606, %v605
        %vm610 = vcmask 261120
        %v612 = vsel %vm610, %v607, 0
        %v615 = vsel %vm610, %v608, 0
        %v618 = vsel %vm610, %v609, 0
        %620 = vmatprep.subr.bf16.mxu0 0
        %621 = vmatpush1.bf16.msra.mxu0 0
        %622 = vmatprep.subr.bf16.mxu0 0
        %623 = vmatpush1.bf16.msra.mxu0 0
        %624 = vmatprep.subr.bf16.mxu0 0
        %625 = vmatpush1.bf16.msra.mxu0 0
        %626 = vmatprep.subr.bf16.mxu0 0
        %627 = vmatpush1.bf16.msra.mxu0 0
        %628 = vmatprep.subr.bf16.mxu0 0
        %629 = vmatpush1.bf16.msra.mxu0 0
        %630 = vmatprep.subr.bf16.mxu0 0
        %631 = vmatpush1.bf16.msra.mxu0 0
        %632 = vmatprep.subr.bf16.mxu0 0
        %633 = vmatpush1.bf16.msra.mxu0 %v507
        %634 = vmatprep.subr.bf16.mxu0 0
        %635 = vmatpush1.bf16.msra.mxu0 %v506
        %636 = vmatprep.subr.bf16.mxu0 0
        %637 = vmatpush2.bf16.msra.mxu0 0
        %638 = vmatprep.subr.bf16.mxu0 0
        %639 = vmatpush2.bf16.msra.mxu0 0
        %640 = vmatprep.subr.bf16.mxu0 0
        %641 = vmatpush2.bf16.msra.mxu0 0
        %642 = vmatprep.subr.bf16.mxu0 0
        %643 = vmatpush2.bf16.msra.mxu0 0
        %644 = vmatprep.subr.bf16.mxu0 0
        %645 = vmatpush2.bf16.msra.mxu0 0
        %646 = vmatprep.subr.bf16.mxu0 0
        %647 = vmatpush2.bf16.msra.mxu0 0
        %648 = vmatprep.subr.bf16.mxu0 0
        %649 = vmatpush2.bf16.msra.mxu0 0
        %650 = vmatprep.subr.bf16.mxu0 0
        %651 = vmatpush2.bf16.msra.mxu0 0
        %652 = vmatprep.mubr.bf16.mxu0 0
        %653 = vmatmul.mubr.bf16.gmra.mxu0 %v612
        %v654 = vpop.f32.mrf.mxu0
        %v655 = vadd.f32 %v573, %v654
        %v656 = vpop.f32.mrf.mxu0
        %v657 = vpop.f32.mrf.mxu0
        %v658 = vadd.f32 %v576, %v657
        %v659 = vpop.f32.mrf.mxu0
        %660 = vmatprep.mubr.bf16.mxu0 0
        %661 = vmatmul.mubr.bf16.gmra.mxu0 %v615
        %v662 = vpop.f32.mrf.mxu0
        %v663 = vadd.f32 %v581, %v662
        %v664 = vpop.f32.mrf.mxu0
        %v665 = vpop.f32.mrf.mxu0
        %v666 = vadd.f32 %v584, %v665
        %v667 = vpop.f32.mrf.mxu0
        %668 = vmatprep.mubr.bf16.mxu0 0
        %669 = vmatmul.mubr.bf16.gmra.mxu0 %v618
        %v670 = vpop.f32.mrf.mxu0
        %v671 = vadd.f32 %v589, %v670
        %v672 = vpop.f32.mrf.mxu0
        %v673 = vpop.f32.mrf.mxu0
        %v674 = vadd.f32 %v592, %v673
        %v675 = vpop.f32.mrf.mxu0
        %676 = vdwg.mxu0
        %v677 = vlaneseq
        %v678 = vshrl.u32 %v677, 7
        %v679 = vsub.s32 0, %v678
        %v680 = vrot.slane %v407, %v679
        %v681 = vadd.f32 %v655, %v680
        %v682 = vadd.f32 %v658, %v680
        %v683 = vadd.f32 %v663, %v680
        %v684 = vadd.f32 %v666, %v680
        %v685 = vadd.f32 %v671, %v680
        %v686 = vadd.f32 %v674, %v680
        %v687 = vmax.f32 %v681, 0.0
        %v688 = vmax.f32 %v682, 0.0
        %v689 = vmax.f32 %v683, 0.0
        %v690 = vmax.f32 %v684, 0.0
        %v691 = vmax.f32 %v685, 0.0
        %v692 = vmax.f32 %v686, 0.0
        %v693 = vpack.c.bf16 %v688, %v687
        %v694 = vpack.c.bf16 %v690, %v689
        %v695 = vpack.c.bf16 %v692, %v691
        %v696 = vlaneseq
        %v697 = vshrl.u32 %v696, 7
        %v698 = vsub.s32 1, %v697
        %v699 = vrot.slane %v407, %v698
        %v704 = vunpack.c.l.b16 %v387
        %v705 = vunpack.c.l.b16 %v388
        %v706 = vunpack.c.l.b16 %v389
        %v707 = vunpack.c.l.b16 %v390
        %v708 = vpack.c.b16 %v705, %v704
        %v709 = vpack.c.b16 %v707, %v706
        %v713 = vsel %vm610, %v693, 0
        %v716 = vsel %vm610, %v694, 0
        %v719 = vsel %vm610, %v695, 0
        %721 = vmatprep.subr.bf16.mxu0 0
        %722 = vmatpush1.bf16.msra.mxu0 0
        %723 = vmatprep.subr.bf16.mxu0 0
        %724 = vmatpush1.bf16.msra.mxu0 0
        %725 = vmatprep.subr.bf16.mxu0 0
        %726 = vmatpush1.bf16.msra.mxu0 0
        %727 = vmatprep.subr.bf16.mxu0 0
        %728 = vmatpush1.bf16.msra.mxu0 0
        %729 = vmatprep.subr.bf16.mxu0 0
        %730 = vmatpush1.bf16.msra.mxu0 0
        %731 = vmatprep.subr.bf16.mxu0 0
        %732 = vmatpush1.bf16.msra.mxu0 0
        %733 = vmatprep.subr.bf16.mxu0 0
        %734 = vmatpush1.bf16.msra.mxu0 %v709
        %735 = vmatprep.subr.bf16.mxu0 0
        %736 = vmatpush1.bf16.msra.mxu0 %v708
        %737 = vmatprep.subr.bf16.mxu0 0
        %738 = vmatpush2.bf16.msra.mxu0 0
        %739 = vmatprep.subr.bf16.mxu0 0
        %740 = vmatpush2.bf16.msra.mxu0 0
        %741 = vmatprep.subr.bf16.mxu0 0
        %742 = vmatpush2.bf16.msra.mxu0 0
        %743 = vmatprep.subr.bf16.mxu0 0
        %744 = vmatpush2.bf16.msra.mxu0 0
        %745 = vmatprep.subr.bf16.mxu0 0
        %746 = vmatpush2.bf16.msra.mxu0 0
        %747 = vmatprep.subr.bf16.mxu0 0
        %748 = vmatpush2.bf16.msra.mxu0 0
        %749 = vmatprep.subr.bf16.mxu0 0
        %750 = vmatpush2.bf16.msra.mxu0 0
        %751 = vmatprep.subr.bf16.mxu0 0
        %752 = vmatpush2.bf16.msra.mxu0 0
        %753 = vmatprep.mubr.bf16.mxu0 0
        %754 = vmatmul.mubr.bf16.gmra.mxu0 %v713
        %v755 = vpop.f32.mrf.mxu0
        %v756 = vadd.f32 %v699, %v755
        %v757 = vpop.f32.mrf.mxu0
        %v758 = vpop.f32.mrf.mxu0
        %v759 = vadd.f32 %v699, %v758
        %v760 = vpop.f32.mrf.mxu0
        %761 = vmatprep.mubr.bf16.mxu0 0
        %762 = vmatmul.mubr.bf16.gmra.mxu0 %v716
        %v763 = vpop.f32.mrf.mxu0
        %v764 = vadd.f32 %v699, %v763
        %v765 = vpop.f32.mrf.mxu0
        %v766 = vpop.f32.mrf.mxu0
        %v767 = vadd.f32 %v699, %v766
        %v768 = vpop.f32.mrf.mxu0
        %769 = vmatprep.mubr.bf16.mxu0 0
        %770 = vmatmul.mubr.bf16.gmra.mxu0 %v719
        %v771 = vpop.f32.mrf.mxu0
        %v772 = vadd.f32 %v699, %v771
        %v773 = vpop.f32.mrf.mxu0
        %v774 = vpop.f32.mrf.mxu0
        %v775 = vadd.f32 %v699, %v774
        %v776 = vpop.f32.mrf.mxu0
        %777 = vdwg.mxu0
        %v778 = vpack.c.bf16 %v759, %v756
        %v779 = vpack.c.bf16 %v767, %v764
        %v780 = vpack.c.bf16 %v775, %v772
        %v783 = vunpack.c.l.b16 %v367
        %v784 = vunpack.c.l.b16 %v368
        %v785 = vpack.c.b16 %v784, %v783
        %vm786 = vcmask 392192
        %v788 = vsel %vm786, %v785, 0
        %790 = vmatprep.subr.bf16.mxu0 0
        %791 = vmatpush1.bf16.msra.mxu0 0
        %792 = vmatprep.subr.bf16.mxu0 0
        %793 = vmatpush1.bf16.msra.mxu0 0
        %794 = vmatprep.subr.bf16.mxu0 0
        %795 = vmatpush1.bf16.msra.mxu0 0
        %796 = vmatprep.subr.bf16.mxu0 0
        %797 = vmatpush1.bf16.msra.mxu0 0
        %798 = vmatprep.subr.bf16.mxu0 0
        %799 = vmatpush1.bf16.msra.mxu0 0
        %800 = vmatprep.subr.bf16.mxu0 0
        %801 = vmatpush1.bf16.msra.mxu0 %v780
        %802 = vmatprep.subr.bf16.mxu0 0
        %803 = vmatpush1.bf16.msra.mxu0 %v779
        %804 = vmatprep.subr.bf16.mxu0 0
        %805 = vmatpush1.bf16.msra.mxu0 %v778
        %806 = vmatprep.subr.bf16.mxu0 0
        %807 = vmatpush2.bf16.msra.mxu0 0
        %808 = vmatprep.subr.bf16.mxu0 0
        %809 = vmatpush2.bf16.msra.mxu0 0
        %810 = vmatprep.subr.bf16.mxu0 0
        %811 = vmatpush2.bf16.msra.mxu0 0
        %812 = vmatprep.subr.bf16.mxu0 0
        %813 = vmatpush2.bf16.msra.mxu0 0
        %814 = vmatprep.subr.bf16.mxu0 0
        %815 = vmatpush2.bf16.msra.mxu0 0
        %816 = vmatprep.subr.bf16.mxu0 0
        %817 = vmatpush2.bf16.msra.mxu0 0
        %818 = vmatprep.subr.bf16.mxu0 0
        %819 = vmatpush2.bf16.msra.mxu0 0
        %820 = vmatprep.subr.bf16.mxu0 0
        %821 = vmatpush2.bf16.msra.mxu0 0
        %822 = vmatprep.mubr.bf16.mxu0 0
        %823 = vmatmul.mubr.bf16.gmra.mxu0 %v788
        %v824 = vpop.f32.mrf.mxu0
        %v825 = vadd.f32 0.0, %v824
        %v826 = vpop.f32.mrf.mxu0
        %v827 = vpop.f32.mrf.mxu0
        %v828 = vadd.f32 0.0, %v827
        %v829 = vpop.f32.mrf.mxu0
        %830 = vdwg.mxu0
        %v831 = vmax.f32 %v825, 0.0
        %v832 = vmax.f32 %v828, 0.0
        %v833 = vpack.c.bf16 %v832, %v831
        %v836 = vunpack.c.l.b16 %v369
        %v837 = vunpack.c.l.b16 %v370
        %v838 = vpack.c.b16 %v837, %v836
        %v840 = vsel %vm414, %v838, 0
        %842 = vmatprep.subr.bf16.mxu0 0
        %843 = vmatpush1.bf16.msra.mxu0 0
        %844 = vmatprep.subr.bf16.mxu0 0
        %845 = vmatpush1.bf16.msra.mxu0 0
        %846 = vmatprep.subr.bf16.mxu0 0
        %847 = vmatpush1.bf16.msra.mxu0 0
        %848 = vmatprep.subr.bf16.mxu0 0
        %849 = vmatpush1.bf16.msra.mxu0 0
        %850 = vmatprep.subr.bf16.mxu0 0
        %851 = vmatpush1.bf16.msra.mxu0 0
        %852 = vmatprep.subr.bf16.mxu0 0
        %853 = vmatpush1.bf16.msra.mxu0 0
        %854 = vmatprep.subr.bf16.mxu0 0
        %855 = vmatpush1.bf16.msra.mxu0 0
        %856 = vmatprep.subr.bf16.mxu0 0
        %857 = vmatpush1.bf16.msra.mxu0 %v833
        %858 = vmatprep.subr.bf16.mxu0 0
        %859 = vmatpush2.bf16.msra.mxu0 0
        %860 = vmatprep.subr.bf16.mxu0 0
        %861 = vmatpush2.bf16.msra.mxu0 0
        %862 = vmatprep.subr.bf16.mxu0 0
        %863 = vmatpush2.bf16.msra.mxu0 0
        %864 = vmatprep.subr.bf16.mxu0 0
        %865 = vmatpush2.bf16.msra.mxu0 0
        %866 = vmatprep.subr.bf16.mxu0 0
        %867 = vmatpush2.bf16.msra.mxu0 0
        %868 = vmatprep.subr.bf16.mxu0 0
        %869 = vmatpush2.bf16.msra.mxu0 0
        %870 = vmatprep.subr.bf16.mxu0 0
        %871 = vmatpush2.bf16.msra.mxu0 0
        %872 = vmatprep.subr.bf16.mxu0 0
        %873 = vmatpush2.bf16.msra.mxu0 0
        %874 = vmatprep.mubr.bf16.mxu0 0
        %875 = vmatmul.mubr.bf16.gmra.mxu0 %v840
        %v876 = vpop.f32.mrf.mxu0
        %v877 = vadd.f32 0.0, %v876
        %v878 = vpop.f32.mrf.mxu0
        %v879 = vpop.f32.mrf.mxu0
        %v880 = vadd.f32 0.0, %v879
        %v881 = vpop.f32.mrf.mxu0
        %882 = vdwg.mxu0
        %v883 = vpack.c.bf16 %v880, %v877
        %884 = vmatprep.subr.bf16.mxu0 0
        %885 = vmatpush1.bf16.msra.mxu0 0
        %886 = vmatprep.subr.bf16.mxu0 0
        %887 = vmatpush1.bf16.msra.mxu0 0
        %888 = vmatprep.subr.bf16.mxu0 0
        %889 = vmatpush1.bf16.msra.mxu0 0
        %890 = vmatprep.subr.bf16.mxu0 0
        %891 = vmatpush1.bf16.msra.mxu0 0
        %892 = vmatprep.subr.bf16.mxu0 0
        %893 = vmatpush1.bf16.msra.mxu0 0
        %894 = vmatprep.subr.bf16.mxu0 0
        %895 = vmatpush1.bf16.msra.mxu0 0
        %896 = vmatprep.subr.bf16.mxu0 0
        %897 = vmatpush1.bf16.msra.mxu0 0
        %898 = vmatprep.subr.bf16.mxu0 0
        %899 = vmatpush1.bf16.msra.mxu0 %v883
        %900 = vmatprep.subr.bf16.mxu0 0
        %901 = vmatpush2.bf16.msra.mxu0 0
        %902 = vmatprep.subr.bf16.mxu0 0
        %903 = vmatpush2.bf16.msra.mxu0 0
        %904 = vmatprep.subr.bf16.mxu0 0
        %905 = vmatpush2.bf16.msra.mxu0 0
        %906 = vmatprep.subr.bf16.mxu0 0
        %907 = vmatpush2.bf16.msra.mxu0 0
        %908 = vmatprep.subr.bf16.mxu0 0
        %909 = vmatpush2.bf16.msra.mxu0 0
        %910 = vmatprep.subr.bf16.mxu0 0
        %911 = vmatpush2.bf16.msra.mxu0 0
        %912 = vmatprep.subr.bf16.mxu0 0
        %913 = vmatpush2.bf16.msra.mxu0 0
        %914 = vmatprep.subr.bf16.mxu0 0
        %915 = vmatpush2.bf16.msra.mxu0 0
        %916 = vmatprep.mubr.bf16.mxu0 0
        %917 = vmatmul.mubr.bf16.gmra.mxu0 %v840
        %v918 = vpop.f32.mrf.mxu0
        %v919 = vadd.f32 0.0, %v918
        %v920 = vpop.f32.mrf.mxu0
        %v921 = vpop.f32.mrf.mxu0
        %v922 = vadd.f32 0.0, %v921
        %v923 = vpop.f32.mrf.mxu0
        %924 = vdwg.mxu0
        %v925 = vpack.c.bf16 %v922, %v919
        %926 = vmatprep.subr.bf16.mxu0 0
        %927 = vmatpush1.bf16.msra.mxu0 0
        %928 = vmatprep.subr.bf16.mxu0 0
        %929 = vmatpush1.bf16.msra.mxu0 0
        %930 = vmatprep.subr.bf16.mxu0 0
        %931 = vmatpush1.bf16.msra.mxu0 0
        %932 = vmatprep.subr.bf16.mxu0 0
        %933 = vmatpush1.bf16.msra.mxu0 0
        %934 = vmatprep.subr.bf16.mxu0 0
        %935 = vmatpush1.bf16.msra.mxu0 0
        %936 = vmatprep.subr.bf16.mxu0 0
        %937 = vmatpush1.bf16.msra.mxu0 0
        %938 = vmatprep.subr.bf16.mxu0 0
        %939 = vmatpush1.bf16.msra.mxu0 0
        %940 = vmatprep.subr.bf16.mxu0 0
        %941 = vmatpush1.bf16.msra.mxu0 %v925
        %942 = vmatprep.subr.bf16.mxu0 0
        %943 = vmatpush2.bf16.msra.mxu0 0
        %944 = vmatprep.subr.bf16.mxu0 0
        %945 = vmatpush2.bf16.msra.mxu0 0
        %946 = vmatprep.subr.bf16.mxu0 0
        %947 = vmatpush2.bf16.msra.mxu0 0
        %948 = vmatprep.subr.bf16.mxu0 0
        %949 = vmatpush2.bf16.msra.mxu0 0
        %950 = vmatprep.subr.bf16.mxu0 0
        %951 = vmatpush2.bf16.msra.mxu0 0
        %952 = vmatprep.subr.bf16.mxu0 0
        %953 = vmatpush2.bf16.msra.mxu0 0
        %954 = vmatprep.subr.bf16.mxu0 0
        %955 = vmatpush2.bf16.msra.mxu0 0
        %956 = vmatprep.subr.bf16.mxu0 0
        %957 = vmatpush2.bf16.msra.mxu0 0
        %958 = vmatprep.mubr.bf16.mxu0 0
        %959 = vmatmul.mubr.bf16.gmra.mxu0 %v840
        %v960 = vpop.f32.mrf.mxu0
        %v961 = vadd.f32 0.0, %v960
        %v962 = vpop.f32.mrf.mxu0
        %v963 = vpop.f32.mrf.mxu0
        %v964 = vadd.f32 0.0, %v963
        %v965 = vpop.f32.mrf.mxu0
        %966 = vdwg.mxu0
        %v967 = vpack.c.bf16 %v964, %v961
        %969 = vrot.lane.b32.xlu0 %v883, 32
        %v970 = vpop.permute.xlu0 %969
        %972 = vrot.lane.b32.xlu0 %v925, 64
        %v973 = vpop.permute.xlu0 %972
        %975 = vrot.lane.b32.xlu0 %v967, 96
        %v976 = vpop.permute.xlu0 %975
        %v979 = vsel %vm610, %v833, %v970
        %vm980 = vcmask 523264
        %v982 = vsel %vm980, %v979, %v973
        %vm983 = vcmask 785408
        %v985 = vsel %vm983, %v982, %v976
        %v987 = vlaneseq
        %v988 = vshrl.u32 %v987, 7
        %v989 = vsub.s32 2, %v988
        %v990 = vrot.slane %v407, %v989
        %v1007 = vunpack.c.l.b16 %v391
        %v1008 = vunpack.c.l.b16 %v392
        %v1009 = vunpack.c.l.b16 %v393
        %v1010 = vunpack.c.l.b16 %v394
        %v1011 = vunpack.c.l.b16 %v395
        %v1012 = vunpack.c.l.b16 %v396
        %v1013 = vunpack.c.l.b16 %v397
        %v1014 = vunpack.c.l.b16 %v398
        %v1015 = vunpack.c.l.b16 %v399
        %v1016 = vunpack.c.l.b16 %v400
        %v1017 = vunpack.c.l.b16 %v401
        %v1018 = vunpack.c.l.b16 %v402
        %v1019 = vunpack.c.l.b16 %v403
        %v1020 = vunpack.c.l.b16 %v404
        %v1021 = vunpack.c.l.b16 %v405
        %v1022 = vunpack.c.l.b16 %v406
        %v1023 = vpack.c.b16 %v1008, %v1007
        %v1024 = vpack.c.b16 %v1010, %v1009
        %v1025 = vpack.c.b16 %v1012, %v1011
        %v1026 = vpack.c.b16 %v1014, %v1013
        %v1027 = vpack.c.b16 %v1016, %v1015
        %v1028 = vpack.c.b16 %v1018, %v1017
        %v1029 = vpack.c.b16 %v1020, %v1019
        %v1030 = vpack.c.b16 %v1022, %v1021
        %1039 = vmatprep.subr.bf16.mxu0 0
        %1040 = vmatpush1.bf16.msra.mxu0 %v1030
        %1041 = vmatprep.subr.bf16.mxu0 0
        %1042 = vmatpush1.bf16.msra.mxu0 %v1029
        %1043 = vmatprep.subr.bf16.mxu0 0
        %1044 = vmatpush1.bf16.msra.mxu0 %v1028
        %1045 = vmatprep.subr.bf16.mxu0 0
        %1046 = vmatpush1.bf16.msra.mxu0 %v1027
        %1047 = vmatprep.subr.bf16.mxu0 0
        %1048 = vmatpush1.bf16.msra.mxu0 %v1026
        %1049 = vmatprep.subr.bf16.mxu0 0
        %1050 = vmatpush1.bf16.msra.mxu0 %v1025
        %1051 = vmatprep.subr.bf16.mxu0 0
        %1052 = vmatpush1.bf16.msra.mxu0 %v1024
        %1053 = vmatprep.subr.bf16.mxu0 0
        %1054 = vmatpush1.bf16.msra.mxu0 %v1023
        %1055 = vmatprep.subr.bf16.mxu0 0
        %1056 = vmatpush2.bf16.msra.mxu0 0
        %1057 = vmatprep.subr.bf16.mxu0 0
        %1058 = vmatpush2.bf16.msra.mxu0 0
        %1059 = vmatprep.subr.bf16.mxu0 0
        %1060 = vmatpush2.bf16.msra.mxu0 0
        %1061 = vmatprep.subr.bf16.mxu0 0
        %1062 = vmatpush2.bf16.msra.mxu0 0
        %1063 = vmatprep.subr.bf16.mxu0 0
        %1064 = vmatpush2.bf16.msra.mxu0 0
        %1065 = vmatprep.subr.bf16.mxu0 0
        %1066 = vmatpush2.bf16.msra.mxu0 0
        %1067 = vmatprep.subr.bf16.mxu0 0
        %1068 = vmatpush2.bf16.msra.mxu0 0
        %1069 = vmatprep.subr.bf16.mxu0 0
        %1070 = vmatpush2.bf16.msra.mxu0 0
        %1071 = vmatprep.mubr.bf16.mxu0 0
        %1072 = vmatmul.mubr.bf16.gmra.mxu0 %v985
        %v1073 = vpop.f32.mrf.mxu0
        %v1074 = vadd.f32 %v990, %v1073
        %v1075 = vpop.f32.mrf.mxu0
        %v1076 = vpop.f32.mrf.mxu0
        %v1077 = vadd.f32 %v990, %v1076
        %v1078 = vpop.f32.mrf.mxu0
        %1079 = vdwg.mxu0
        %v1080 = vmax.f32 %v1074, 0.0
        %v1081 = vmax.f32 %v1077, 0.0
        %v1082 = vpack.c.bf16 %v1081, %v1080
        %v1083 = vld [vmem:[%s7] sm:$0xf]
        %v1084 = vld [vmem:[%s7 + $0x4] sm:$0xf]
        %v1085 = vld [vmem:[%s7 + $0x8] sm:$0xf]
        %v1086 = vld [vmem:[%s7 + $0xc] sm:$0xf]
        %v1091 = vunpack.c.l.b16 %v377
        %v1092 = vunpack.c.l.b16 %v378
        %v1093 = vunpack.c.l.b16 %v379
        %v1094 = vunpack.c.l.b16 %v380
        %v1095 = vpack.c.b16 %v1092, %v1091
        %v1096 = vpack.c.b16 %v1094, %v1093
        %v1100 = vsel %vm610, %v1082, 0
        %1102 = vmatprep.subr.bf16.mxu0 0
        %1103 = vmatpush1.bf16.msra.mxu0 0
        %1104 = vmatprep.subr.bf16.mxu0 0
        %1105 = vmatpush1.bf16.msra.mxu0 0
        %1106 = vmatprep.subr.bf16.mxu0 0
        %1107 = vmatpush1.bf16.msra.mxu0 0
        %1108 = vmatprep.subr.bf16.mxu0 0
        %1109 = vmatpush1.bf16.msra.mxu0 0
        %1110 = vmatprep.subr.bf16.mxu0 0
        %1111 = vmatpush1.bf16.msra.mxu0 0
        %1112 = vmatprep.subr.bf16.mxu0 0
        %1113 = vmatpush1.bf16.msra.mxu0 0
        %1114 = vmatprep.subr.bf16.mxu0 0
        %1115 = vmatpush1.bf16.msra.mxu0 %v1096
        %1116 = vmatprep.subr.bf16.mxu0 0
        %1117 = vmatpush1.bf16.msra.mxu0 %v1095
        %1118 = vmatprep.subr.bf16.mxu0 0
        %1119 = vmatpush2.bf16.msra.mxu0 0
        %1120 = vmatprep.subr.bf16.mxu0 0
        %1121 = vmatpush2.bf16.msra.mxu0 0
        %1122 = vmatprep.subr.bf16.mxu0 0
        %1123 = vmatpush2.bf16.msra.mxu0 0
        %1124 = vmatprep.subr.bf16.mxu0 0
        %1125 = vmatpush2.bf16.msra.mxu0 0
        %1126 = vmatprep.subr.bf16.mxu0 0
        %1127 = vmatpush2.bf16.msra.mxu0 0
        %1128 = vmatprep.subr.bf16.mxu0 0
        %1129 = vmatpush2.bf16.msra.mxu0 0
        %1130 = vmatprep.subr.bf16.mxu0 0
        %1131 = vmatpush2.bf16.msra.mxu0 0
        %1132 = vmatprep.subr.bf16.mxu0 0
        %1133 = vmatpush2.bf16.msra.mxu0 0
        %1134 = vmatprep.mubr.bf16.mxu0 0
        %1135 = vmatmul.mubr.bf16.gmra.mxu0 %v1100
        %v1136 = vpop.f32.mrf.mxu0
        %v1137 = vadd.f32 0.0, %v1136
        %v1138 = vpop.f32.mrf.mxu0
        %v1139 = vpop.f32.mrf.mxu0
        %v1140 = vadd.f32 0.0, %v1139
        %v1141 = vpop.f32.mrf.mxu0
        %1142 = vdwg.mxu0
        %v1147 = vunpack.c.l.b16 %v381
        %v1148 = vunpack.c.l.b16 %v382
        %v1149 = vunpack.c.l.b16 %v383
        %v1150 = vunpack.c.l.b16 %v384
        %v1151 = vpack.c.b16 %v1148, %v1147
        %v1152 = vpack.c.b16 %v1150, %v1149
        %1155 = vmatprep.subr.bf16.mxu0 0
        %1156 = vmatpush1.bf16.msra.mxu0 0
        %1157 = vmatprep.subr.bf16.mxu0 0
        %1158 = vmatpush1.bf16.msra.mxu0 0
        %1159 = vmatprep.subr.bf16.mxu0 0
        %1160 = vmatpush1.bf16.msra.mxu0 0
        %1161 = vmatprep.subr.bf16.mxu0 0
        %1162 = vmatpush1.bf16.msra.mxu0 0
        %1163 = vmatprep.subr.bf16.mxu0 0
        %1164 = vmatpush1.bf16.msra.mxu0 0
        %1165 = vmatprep.subr.bf16.mxu0 0
        %1166 = vmatpush1.bf16.msra.mxu0 0
        %1167 = vmatprep.subr.bf16.mxu0 0
        %1168 = vmatpush1.bf16.msra.mxu0 %v1152
        %1169 = vmatprep.subr.bf16.mxu0 0
        %1170 = vmatpush1.bf16.msra.mxu0 %v1151
        %1171 = vmatprep.subr.bf16.mxu0 0
        %1172 = vmatpush2.bf16.msra.mxu0 0
        %1173 = vmatprep.subr.bf16.mxu0 0
        %1174 = vmatpush2.bf16.msra.mxu0 0
        %1175 = vmatprep.subr.bf16.mxu0 0
        %1176 = vmatpush2.bf16.msra.mxu0 0
        %1177 = vmatprep.subr.bf16.mxu0 0
        %1178 = vmatpush2.bf16.msra.mxu0 0
        %1179 = vmatprep.subr.bf16.mxu0 0
        %1180 = vmatpush2.bf16.msra.mxu0 0
        %1181 = vmatprep.subr.bf16.mxu0 0
        %1182 = vmatpush2.bf16.msra.mxu0 0
        %1183 = vmatprep.subr.bf16.mxu0 0
        %1184 = vmatpush2.bf16.msra.mxu0 0
        %1185 = vmatprep.subr.bf16.mxu0 0
        %1186 = vmatpush2.bf16.msra.mxu0 0
        %1187 = vmatprep.mubr.bf16.mxu0 0
        %1188 = vmatmul.mubr.bf16.gmra.mxu0 %v1100
        %v1189 = vpop.f32.mrf.mxu0
        %v1190 = vadd.f32 0.0, %v1189
        %v1191 = vpop.f32.mrf.mxu0
        %v1192 = vpop.f32.mrf.mxu0
        %v1193 = vadd.f32 0.0, %v1192
        %v1194 = vpop.f32.mrf.mxu0
        %1195 = vdwg.mxu0
        %v1196 = vpack.c.bf16 %v1140, %v1137
        %v1197 = vpack.c.bf16 %v1193, %v1190
        %v1200 = vunpack.c.l.b16 %v385
        %v1201 = vunpack.c.l.b16 %v386
        %v1202 = vpack.c.b16 %v1201, %v1200
        %1204 = vmatprep.subr.bf16.mxu0 0
        %1205 = vmatpush1.bf16.msra.mxu0 0
        %1206 = vmatprep.subr.bf16.mxu0 0
        %1207 = vmatpush1.bf16.msra.mxu0 0
        %1208 = vmatprep.subr.bf16.mxu0 0
        %1209 = vmatpush1.bf16.msra.mxu0 0
        %1210 = vmatprep.subr.bf16.mxu0 0
        %1211 = vmatpush1.bf16.msra.mxu0 0
        %1212 = vmatprep.subr.bf16.mxu0 0
        %1213 = vmatpush1.bf16.msra.mxu0 0
        %1214 = vmatprep.subr.bf16.mxu0 0
        %1215 = vmatpush1.bf16.msra.mxu0 0
        %1216 = vmatprep.subr.bf16.mxu0 0
        %1217 = vmatpush1.bf16.msra.mxu0 0
        %1218 = vmatprep.subr.bf16.mxu0 0
        %1219 = vmatpush1.bf16.msra.mxu0 %v1202
        %1220 = vmatprep.subr.bf16.mxu0 0
        %1221 = vmatpush2.bf16.msra.mxu0 0
        %1222 = vmatprep.subr.bf16.mxu0 0
        %1223 = vmatpush2.bf16.msra.mxu0 0
        %1224 = vmatprep.subr.bf16.mxu0 0
        %1225 = vmatpush2.bf16.msra.mxu0 0
        %1226 = vmatprep.subr.bf16.mxu0 0
        %1227 = vmatpush2.bf16.msra.mxu0 0
        %1228 = vmatprep.subr.bf16.mxu0 0
        %1229 = vmatpush2.bf16.msra.mxu0 0
        %1230 = vmatprep.subr.bf16.mxu0 0
        %1231 = vmatpush2.bf16.msra.mxu0 0
        %1232 = vmatprep.subr.bf16.mxu0 0
        %1233 = vmatpush2.bf16.msra.mxu0 0
        %1234 = vmatprep.subr.bf16.mxu0 0
        %1235 = vmatpush2.bf16.msra.mxu0 0
        %1236 = vmatprep.mubr.bf16.mxu0 0
        %1237 = vmatmul.mubr.bf16.gmra.mxu0 %v530
        %v1238 = vpop.f32.mrf.mxu0
        %v1239 = vadd.f32 0.0, %v1238
        %v1240 = vpop.f32.mrf.mxu0
        %v1241 = vpop.f32.mrf.mxu0
        %v1242 = vadd.f32 0.0, %v1241
        %v1243 = vpop.f32.mrf.mxu0
        %1244 = vmatprep.mubr.bf16.mxu0 0
        %1245 = vmatmul.mubr.bf16.gmra.mxu0 %v533
        %v1246 = vpop.f32.mrf.mxu0
        %v1247 = vadd.f32 0.0, %v1246
        %v1248 = vpop.f32.mrf.mxu0
        %v1249 = vpop.f32.mrf.mxu0
        %v1250 = vadd.f32 0.0, %v1249
        %v1251 = vpop.f32.mrf.mxu0
        %1252 = vmatprep.mubr.bf16.mxu0 0
        %1253 = vmatmul.mubr.bf16.gmra.mxu0 %v536
        %v1254 = vpop.f32.mrf.mxu0
        %v1255 = vadd.f32 0.0, %v1254
        %v1256 = vpop.f32.mrf.mxu0
        %v1257 = vpop.f32.mrf.mxu0
        %v1258 = vadd.f32 0.0, %v1257
        %v1259 = vpop.f32.mrf.mxu0
        %1260 = vdwg.mxu0
        %1261 = vmatprep.subr.bf16.mxu0 0
        %1262 = vmatpush1.bf16.msra.mxu0 0
        %1263 = vmatprep.subr.bf16.mxu0 0
        %1264 = vmatpush1.bf16.msra.mxu0 0
        %1265 = vmatprep.subr.bf16.mxu0 0
        %1266 = vmatpush1.bf16.msra.mxu0 0
        %1267 = vmatprep.subr.bf16.mxu0 0
        %1268 = vmatpush1.bf16.msra.mxu0 0
        %1269 = vmatprep.subr.bf16.mxu0 0
        %1270 = vmatpush1.bf16.msra.mxu0 0
        %1271 = vmatprep.subr.bf16.mxu0 0
        %1272 = vmatpush1.bf16.msra.mxu0 0
        %1273 = vmatprep.subr.bf16.mxu0 0
        %1274 = vmatpush1.bf16.msra.mxu0 %v1197
        %1275 = vmatprep.subr.bf16.mxu0 0
        %1276 = vmatpush1.bf16.msra.mxu0 %v1196
        %1277 = vmatprep.subr.bf16.mxu0 0
        %1278 = vmatpush2.bf16.msra.mxu0 0
        %1279 = vmatprep.subr.bf16.mxu0 0
        %1280 = vmatpush2.bf16.msra.mxu0 0
        %1281 = vmatprep.subr.bf16.mxu0 0
        %1282 = vmatpush2.bf16.msra.mxu0 0
        %1283 = vmatprep.subr.bf16.mxu0 0
        %1284 = vmatpush2.bf16.msra.mxu0 0
        %1285 = vmatprep.subr.bf16.mxu0 0
        %1286 = vmatpush2.bf16.msra.mxu0 0
        %1287 = vmatprep.subr.bf16.mxu0 0
        %1288 = vmatpush2.bf16.msra.mxu0 0
        %1289 = vmatprep.subr.bf16.mxu0 0
        %1290 = vmatpush2.bf16.msra.mxu0 0
        %1291 = vmatprep.subr.bf16.mxu0 0
        %1292 = vmatpush2.bf16.msra.mxu0 0
        %1293 = vmatprep.mubr.bf16.mxu0 0
        %1294 = vmatmul.mubr.bf16.gmra.mxu0 %v612
        %v1295 = vpop.f32.mrf.mxu0
        %v1296 = vadd.f32 %v1239, %v1295
        %v1297 = vpop.f32.mrf.mxu0
        %v1298 = vpop.f32.mrf.mxu0
        %v1299 = vadd.f32 %v1242, %v1298
        %v1300 = vpop.f32.mrf.mxu0
        %1301 = vmatprep.mubr.bf16.mxu0 0
        %1302 = vmatmul.mubr.bf16.gmra.mxu0 %v615
        %v1303 = vpop.f32.mrf.mxu0
        %v1304 = vadd.f32 %v1247, %v1303
        %v1305 = vpop.f32.mrf.mxu0
        %v1306 = vpop.f32.mrf.mxu0
        %v1307 = vadd.f32 %v1250, %v1306
        %v1308 = vpop.f32.mrf.mxu0
        %1309 = vmatprep.mubr.bf16.mxu0 0
        %1310 = vmatmul.mubr.bf16.gmra.mxu0 %v618
        %v1311 = vpop.f32.mrf.mxu0
        %v1312 = vadd.f32 %v1255, %v1311
        %v1313 = vpop.f32.mrf.mxu0
        %v1314 = vpop.f32.mrf.mxu0
        %v1315 = vadd.f32 %v1258, %v1314
        %v1316 = vpop.f32.mrf.mxu0
        %1317 = vdwg.mxu0
        %v1318 = vlaneseq
        %v1319 = vshrl.u32 %v1318, 7
        %v1320 = vsub.s32 3, %v1319
        %v1321 = vrot.slane %v407, %v1320
        %v1322 = vadd.f32 %v1296, %v1321
        %v1323 = vadd.f32 %v1299, %v1321
        %v1324 = vadd.f32 %v1304, %v1321
        %v1325 = vadd.f32 %v1307, %v1321
        %v1326 = vadd.f32 %v1312, %v1321
        %v1327 = vadd.f32 %v1315, %v1321
        %v1328 = vmax.f32 %v1322, 0.0
        %v1329 = vmax.f32 %v1323, 0.0
        %v1330 = vmax.f32 %v1324, 0.0
        %v1331 = vmax.f32 %v1325, 0.0
        %v1332 = vmax.f32 %v1326, 0.0
        %v1333 = vmax.f32 %v1327, 0.0
        %v1334 = vpack.c.bf16 %v1329, %v1328
        %v1335 = vpack.c.bf16 %v1331, %v1330
        %v1336 = vpack.c.bf16 %v1333, %v1332
        %v1337 = vlaneseq
        %v1338 = vshrl.u32 %v1337, 7
        %v1339 = vsub.s32 4, %v1338
        %v1340 = vrot.slane %v407, %v1339
        %v1345 = vunpack.c.l.b16 %v1083
        %v1346 = vunpack.c.l.b16 %v1084
        %v1347 = vunpack.c.l.b16 %v1085
        %v1348 = vunpack.c.l.b16 %v1086
        %v1349 = vpack.c.b16 %v1346, %v1345
        %v1350 = vpack.c.b16 %v1348, %v1347
        %v1354 = vsel %vm610, %v1334, 0
        %v1357 = vsel %vm610, %v1335, 0
        %v1360 = vsel %vm610, %v1336, 0
        %1362 = vmatprep.subr.bf16.mxu0 0
        %1363 = vmatpush1.bf16.msra.mxu0 0
        %1364 = vmatprep.subr.bf16.mxu0 0
        %1365 = vmatpush1.bf16.msra.mxu0 0
        %1366 = vmatprep.subr.bf16.mxu0 0
        %1367 = vmatpush1.bf16.msra.mxu0 0
        %1368 = vmatprep.subr.bf16.mxu0 0
        %1369 = vmatpush1.bf16.msra.mxu0 0
        %1370 = vmatprep.subr.bf16.mxu0 0
        %1371 = vmatpush1.bf16.msra.mxu0 0
        %1372 = vmatprep.subr.bf16.mxu0 0
        %1373 = vmatpush1.bf16.msra.mxu0 0
        %1374 = vmatprep.subr.bf16.mxu0 0
        %1375 = vmatpush1.bf16.msra.mxu0 %v1350
        %1376 = vmatprep.subr.bf16.mxu0 0
        %1377 = vmatpush1.bf16.msra.mxu0 %v1349
        %1378 = vmatprep.subr.bf16.mxu0 0
        %1379 = vmatpush2.bf16.msra.mxu0 0
        %1380 = vmatprep.subr.bf16.mxu0 0
        %1381 = vmatpush2.bf16.msra.mxu0 0
        %1382 = vmatprep.subr.bf16.mxu0 0
        %1383 = vmatpush2.bf16.msra.mxu0 0
        %1384 = vmatprep.subr.bf16.mxu0 0
        %1385 = vmatpush2.bf16.msra.mxu0 0
        %1386 = vmatprep.subr.bf16.mxu0 0
        %1387 = vmatpush2.bf16.msra.mxu0 0
        %1388 = vmatprep.subr.bf16.mxu0 0
        %1389 = vmatpush2.bf16.msra.mxu0 0
        %1390 = vmatprep.subr.bf16.mxu0 0
        %1391 = vmatpush2.bf16.msra.mxu0 0
        %1392 = vmatprep.subr.bf16.mxu0 0
        %1393 = vmatpush2.bf16.msra.mxu0 0
        %1394 = vmatprep.mubr.bf16.mxu0 0
        %1395 = vmatmul.mubr.bf16.gmra.mxu0 %v1354
        %v1396 = vpop.f32.mrf.mxu0
        %v1397 = vadd.f32 %v1340, %v1396
        %v1398 = vpop.f32.mrf.mxu0
        %v1399 = vpop.f32.mrf.mxu0
        %v1400 = vadd.f32 %v1340, %v1399
        %v1401 = vpop.f32.mrf.mxu0
        %1402 = vmatprep.mubr.bf16.mxu0 0
        %1403 = vmatmul.mubr.bf16.gmra.mxu0 %v1357
        %v1404 = vpop.f32.mrf.mxu0
        %v1405 = vadd.f32 %v1340, %v1404
        %v1406 = vpop.f32.mrf.mxu0
        %v1407 = vpop.f32.mrf.mxu0
        %v1408 = vadd.f32 %v1340, %v1407
        %v1409 = vpop.f32.mrf.mxu0
        %1410 = vmatprep.mubr.bf16.mxu0 0
        %1411 = vmatmul.mubr.bf16.gmra.mxu0 %v1360
        %v1412 = vpop.f32.mrf.mxu0
        %v1413 = vadd.f32 %v1340, %v1412
        %v1414 = vpop.f32.mrf.mxu0
        %v1415 = vpop.f32.mrf.mxu0
        %v1416 = vadd.f32 %v1340, %v1415
        %v1417 = vpop.f32.mrf.mxu0
        %1418 = vdwg.mxu0
        %v1419 = vpack.c.bf16 %v1400, %v1397
        %v1420 = vpack.c.bf16 %v1408, %v1405
        %v1421 = vpack.c.bf16 %v1416, %v1413
        %1422 = vmatprep.subr.bf16.mxu0 0
        %1423 = vmatpush1.bf16.msra.mxu0 0
        %1424 = vmatprep.subr.bf16.mxu0 0
        %1425 = vmatpush1.bf16.msra.mxu0 0
        %1426 = vmatprep.subr.bf16.mxu0 0
        %1427 = vmatpush1.bf16.msra.mxu0 0
        %1428 = vmatprep.subr.bf16.mxu0 0
        %1429 = vmatpush1.bf16.msra.mxu0 0
        %1430 = vmatprep.subr.bf16.mxu0 0
        %1431 = vmatpush1.bf16.msra.mxu0 0
        %1432 = vmatprep.subr.bf16.mxu0 0
        %1433 = vmatpush1.bf16.msra.mxu0 %v1421
        %1434 = vmatprep.subr.bf16.mxu0 0
        %1435 = vmatpush1.bf16.msra.mxu0 %v1420
        %1436 = vmatprep.subr.bf16.mxu0 0
        %1437 = vmatpush1.bf16.msra.mxu0 %v1419
        %1438 = vmatprep.subr.bf16.mxu0 0
        %1439 = vmatpush2.bf16.msra.mxu0 0
        %1440 = vmatprep.subr.bf16.mxu0 0
        %1441 = vmatpush2.bf16.msra.mxu0 0
        %1442 = vmatprep.subr.bf16.mxu0 0
        %1443 = vmatpush2.bf16.msra.mxu0 0
        %1444 = vmatprep.subr.bf16.mxu0 0
        %1445 = vmatpush2.bf16.msra.mxu0 0
        %1446 = vmatprep.subr.bf16.mxu0 0
        %1447 = vmatpush2.bf16.msra.mxu0 0
        %1448 = vmatprep.subr.bf16.mxu0 0
        %1449 = vmatpush2.bf16.msra.mxu0 0
        %1450 = vmatprep.subr.bf16.mxu0 0
        %1451 = vmatpush2.bf16.msra.mxu0 0
        %1452 = vmatprep.subr.bf16.mxu0 0
        %1453 = vmatpush2.bf16.msra.mxu0 0
        %1454 = vmatprep.mubr.bf16.mxu0 0
        %1455 = vmatmul.mubr.bf16.gmra.mxu0 %v788
        %v1456 = vpop.f32.mrf.mxu0
        %v1457 = vadd.f32 0.0, %v1456
        %v1458 = vpop.f32.mrf.mxu0
        %v1459 = vpop.f32.mrf.mxu0
        %v1460 = vadd.f32 0.0, %v1459
        %v1461 = vpop.f32.mrf.mxu0
        %1462 = vdwg.mxu0
        %1463 = vst [vmem:[%s340] sm:$0xff] %v1457
        %1464 = vst [vmem:[%s340 + $0x8] sm:$0xff] %v1460
        %s1465 = sand.u32 %s230, 1
        %s1466 = scalar_lea.sflag [#allocation3], %s1465
        %s1467 = sand.u32 %s230, 1
        %s1468 = smul.addr %s1467, 16
        %s1469 = scalar_lea.vmem [#allocation2], %s1468
        // Predicated region
        $region57: #{tpu_custom_call.1} parent=55 // pred_check
          %p1470 = pneg %p240
        $region58: #{tpu_custom_call.1} parent=55 // pred_check_branch
          %1472 = sbr.rel (%p1470) target = $region60
        $region59: #{tpu_custom_call.1} parent=55 // pred_region
          %s1474 = ssub.s32 256, 256
          %1475 = vsyncadd %s1466, %s1474
          %s1476 = smul.addr %s23, 2
          %s1477 = smul.addr %s1476, 128
          %s1478 = scalar_lea.hbm %s9, %s1477
          %s1479 = sshll.u32 %s1469, 4
          %s1480 = int_to_ptr.vmem [resolvable:$true] %s1479
          %1485 = dma.vmem_to_hbm [thread:$0]  %s1480, 256, %s1478, %s1466, 128, 128, 8
        $region60: #{tpu_custom_call.1} parent=55 // pred_fallthru
          _
      $region56: #{tpu_custom_call.1} parent=5 // pred_fallthru
        _
      %p1486 = scmp.le.s32.totalorder 2, %s18
      // Predicated region
      $region61: #{tpu_custom_call.1} parent=5 // pred_check
        %p1487 = pneg %p1486
      $region62: #{tpu_custom_call.1} parent=5 // pred_check_branch
        %1489 = sbr.rel (%p1487) target = $region64
      $region63: #{tpu_custom_call.1} parent=5 // pred_region
        %s1490 = ssub.s32 %s18, 2
        // Predicated region
        $region65: #{tpu_custom_call.1} parent=63 // pred_check
          %p1491 = pneg %p246
        $region66: #{tpu_custom_call.1} parent=63 // pred_check_branch
          %1493 = sbr.rel (%p1491) target = $region68
        $region67: #{tpu_custom_call.1} parent=63 // pred_region
          %s1494 = sand.u32 %s231, 1
          %s1495 = scalar_lea.sflag [#allocation3], %s1494
          %s1496 = sand.u32 %s231, 1
          %s1497 = smul.addr %s1496, 16
          %s1498 = scalar_lea.vmem [#allocation2], %s1497
          %1499 = dma.done %s1495, 256
        $region68: #{tpu_custom_call.1} parent=63 // pred_fallthru
          _
      $region64: #{tpu_custom_call.1} parent=5 // pred_fallthru
        _
    $region6: #{tpu_custom_call.1} parent=1 // loop_footer
      %s22 = sadd.s32 1, %s18
    $region7: #{tpu_custom_call.1} parent=1 // loop_footer_branch
      %17 = sbr.rel target = $region3
    $region8: #{tpu_custom_call.1} parent=1 // loop_exit
      _
    %1500 = vsyncpa [#allocation3], 1
    %s1501 = scalar_lea.sflag [#allocation3], 1
    %1502 = vsyncpa %s1501, 1

</llo_original>
